<compile_context>
chip_gen: v7x
topology: tpu7x:2x2x1
jax: 0.10.0
libtpu: 0.0.40
codegen_flags: <defaults>
</compile_context>

<pallas_src>
import functools

import jax
import jax.numpy as jnp
from jax import lax
from jax.experimental import pallas as pl
from jax.experimental.pallas import tpu as pltpu


def _round_up(n: int, m: int) -> int:
    return ((n + m - 1) // m) * m


# --------------------------------------------------------------------------
# Kernel body
# --------------------------------------------------------------------------
def _goal_encoder_kernel(x_ref, w1_ref, w2_ref, w3_ref, vec_ref, o_ref, *,
                         hidden: int, latent: int, l2_normalize: bool):
    """One batch tile of the VisualGoalEncoder forward.

    x_ref   : (TB, in_features)      f32 activation tile (streams per grid step)
    w1_ref  : (in_features, hidden)  bf16 (VMEM-resident, constant index map)
    w2_ref  : (hidden, hidden)       bf16 (VMEM-resident)
    w3_ref  : (hidden, latent)       bf16 (VMEM-resident)
    vec_ref : (5, VP)                f32 packed rows [b1, b2, b3, gamma, beta]
    o_ref   : (TB, latent)           f32 output tile
    """
    b1 = vec_ref[0:1, :hidden]
    b2 = vec_ref[1:2, :hidden]
    b3 = vec_ref[2:3, :latent]
    gamma = vec_ref[3:4, :latent]
    beta = vec_ref[4:5, :latent]

    # MLP: Linear -> ReLU -> Linear -> ReLU -> Linear (bf16 MXU, f32 accumulate)
    x = x_ref[...].astype(jnp.bfloat16)
    h = jnp.dot(x, w1_ref[...], preferred_element_type=jnp.float32) + b1
    h = jnp.maximum(h, 0.0)
    h = jnp.dot(h.astype(jnp.bfloat16), w2_ref[...],
                preferred_element_type=jnp.float32) + b2
    h = jnp.maximum(h, 0.0)
    z = jnp.dot(h.astype(jnp.bfloat16), w3_ref[...],
                preferred_element_type=jnp.float32) + b3

    if l2_normalize:
        # F.normalize(p=2, dim=1, eps=1e-12): x / max(||x||, 1e-12)
        #   == x * rsqrt(max(||x||^2, 1e-24))  (exact for the clamp semantics)
        ssq = jnp.sum(z * z, axis=-1, keepdims=True)
        z = z * lax.rsqrt(jnp.maximum(ssq, jnp.float32(1e-24)))

    # LayerNorm(latent, eps=1e-5). z has exactly `latent` columns -> no mask.
    inv_n = jnp.float32(1.0 / latent)
    mean = jnp.sum(z, axis=-1, keepdims=True) * inv_n
    d = z - mean
    var = jnp.sum(d * d, axis=-1, keepdims=True) * inv_n
    zn = d * lax.rsqrt(var + jnp.float32(1e-5))
    o_ref[...] = (zn * gamma + beta).astype(o_ref.dtype)


# --------------------------------------------------------------------------
# One-time parameter preprocessing (hoisted out of the per-call forward path)
# --------------------------------------------------------------------------
def prepare_params(params):
    """Cast weights to bf16 and pack the five small vectors into one f32 array.

    Call ONCE at parameter-load time; pass the result to every
    `visual_goal_encoder` call (avoids re-doing ~MiBs of HBM traffic + several
    small XLA launches on every forward).
    """
    w1, b1, w2, b2, w3, b3, gamma, beta = params
    in_f, hidden = w1.shape
    latent = w3.shape[1]

    w1b = jnp.asarray(w1, jnp.bfloat16)
    w2b = jnp.asarray(w2, jnp.bfloat16)
    w3b = jnp.asarray(w3, jnp.bfloat16)

    # Pack b1, b2, b3, gamma, beta into one (5, VP) f32 array -> a single DMA.
    VP = _round_up(max(hidden, latent), 128)
    vec = jnp.zeros((5, VP), jnp.float32)
    vec = vec.at[0, :hidden].set(jnp.asarray(b1, jnp.float32).reshape(-1))
    vec = vec.at[1, :hidden].set(jnp.asarray(b2, jnp.float32).reshape(-1))
    vec = vec.at[2, :latent].set(jnp.asarray(b3, jnp.float32).reshape(-1))
    vec = vec.at[3, :latent].set(jnp.asarray(gamma, jnp.float32).reshape(-1))
    vec = vec.at[4, :latent].set(jnp.asarray(beta, jnp.float32).reshape(-1))

    return (w1b, w2b, w3b, vec)


# --------------------------------------------------------------------------
# Forward wrapper
# --------------------------------------------------------------------------
def visual_goal_encoder(x, prepared, *, l2_normalize_goal_embeddings: bool,
                        block_b: int = 512):
    """x: (B, in_features) f32. prepared: output of prepare_params.

    Returns (B, latent_goal_features) f32.
    """
    w1b, w2b, w3b, vec = prepared
    B, in_f = x.shape
    hidden = w1b.shape[1]
    latent = w3b.shape[1]
    VP = vec.shape[1]

    # Batch tile: multiple of 16 (bf16 sublane packing). Ensure >=2 grid steps
    # when B allows it so the 'parallel' axis can use both v7x TensorCores.
    TB = min(block_b, _round_up(B, 16))
    if pl.cdiv(B, TB) == 1 and B > 16:
        TB = _round_up(pl.cdiv(B, 2), 16)
    grid = (pl.cdiv(B, TB),)

    # Right-sized VMEM budget: resident weights (double-buffer upper bound) +
    # streamed x/out tiles + live intermediates + ~50% headroom, clamped well
    # below v7x's 64 MiB per-TC VMEM.
    weight_bytes = 2 * (in_f * hidden + hidden * hidden + hidden * latent)  # bf16
    vec_bytes = 4 * 5 * VP
    stream_bytes = 2 * (TB * in_f * 4 + TB * latent * 4)   # double-buffered tiles
    interm_bytes = TB * (hidden * 6 + max(hidden, latent) * 4)
    budget = int(1.5 * (2 * (weight_bytes + vec_bytes) + stream_bytes
                        + interm_bytes)) + (4 << 20)
    vmem_limit = max(16 << 20, min(budget, 48 << 20))

    kernel = functools.partial(_goal_encoder_kernel, hidden=hidden, latent=latent,
                               l2_normalize=l2_normalize_goal_embeddings)

    def build(single_buffer_weights: bool):
        def const(shape):
            idx = lambda i: (0, 0)
            if single_buffer_weights:
                # Grid-invariant operands: no double-buffer duplication in VMEM.
                return pl.BlockSpec(shape, idx, pipeline_mode=pl.Buffered(1))
            return pl.BlockSpec(shape, idx)

        return pl.pallas_call(
            kernel,
            out_shape=jax.ShapeDtypeStruct((B, latent), jnp.float32),
            grid=grid,
            in_specs=[
                pl.BlockSpec((TB, in_f), lambda i: (i, 0)),   # x tile (streams)
                const((in_f, hidden)),                        # w1 (resident)
                const((hidden, hidden)),                      # w2 (resident)
                const((hidden, latent)),                      # w3 (resident)
                const((5, VP)),                               # packed b1,b2,b3,gamma,beta
            ],
            out_specs=pl.BlockSpec((TB, latent), lambda i: (i, 0)),
            compiler_params=pltpu.CompilerParams(
                dimension_semantics=("parallel",),            # megacore on v7x
                vmem_limit_bytes=vmem_limit,
            ),
        )

    try:
        return build(True)(x, w1b, w2b, w3b, vec)
    except Exception:
        # pipeline_mode=pl.Buffered(1) not supported by this jax version /
        # lowering path -> fall back to default (double-buffered) specs.
        return build(False)(x, w1b, w2b, w3b, vec)


# --------------------------------------------------------------------------
# Synthetic parameters + pure-JAX reference
# --------------------------------------------------------------------------
def init_params(key, in_features, hidden_size, latent_goal_features):
    """Deterministic synthetic parameters (shapes match nn.Linear / nn.LayerNorm)."""
    ks = jax.random.split(key, 8)

    def lin(kw, kb, fan_in, fan_out):
        bound = 1.0 / jnp.sqrt(fan_in)
        w = jax.random.uniform(kw, (fan_in, fan_out), jnp.float32, -bound, bound)
        b = jax.random.uniform(kb, (1, fan_out), jnp.float32, -bound, bound)
        return w, b

    w1, b1 = lin(ks[0], ks[1], in_features, hidden_size)
    w2, b2 = lin(ks[2], ks[3], hidden_size, hidden_size)
    w3, b3 = lin(ks[4], ks[5], hidden_size, latent_goal_features)
    gamma = jnp.ones((1, latent_goal_features), jnp.float32)   # LayerNorm defaults
    beta = jnp.zeros((1, latent_goal_features), jnp.float32)
    return (w1, b1, w2, b2, w3, b3, gamma, beta)


def reference_forward(x, params, *, l2_normalize_goal_embeddings: bool,
                      matmul_dtype=jnp.bfloat16):
    """Pure-JAX reference matching the PyTorch module. Uses the same bf16
    matmul quantization as the kernel (pass matmul_dtype=jnp.float32 for the
    exact f32 PyTorch math)."""
    w1, b1, w2, b2, w3, b3, gamma, beta = params
    dot = lambda a, w: jnp.dot(a.astype(matmul_dtype), w.astype(matmul_dtype),
                               preferred_element_type=jnp.float32)
    h = jnp.maximum(dot(x, w1) + b1, 0.0)
    h = jnp.maximum(dot(h, w2) + b2, 0.0)
    z = dot(h, w3) + b3
    if l2_normalize_goal_embeddings:
        n = jnp.sqrt(jnp.sum(z * z, axis=1, keepdims=True))
        z = z / jnp.maximum(n, 1e-12)
    mean = jnp.mean(z, axis=-1, keepdims=True)
    var = jnp.mean((z - mean) ** 2, axis=-1, keepdims=True)
    return (z - mean) / jnp.sqrt(var + 1e-5) * gamma + beta


if __name__ == "__main__":
    # Small shapes consistent with the module's forward: x is (B, in_features).
    B, in_features, hidden_size, latent = 40, 32, 32, 16
    l2_norm = True  # activation_function="ReLU", l2_normalize_goal_embeddings=True

    key = jax.random.PRNGKey(0)
    kx, kp = jax.random.split(key)
    x = jax.random.normal(kx, (B, in_features), jnp.float32)
    params = init_params(kp, in_features, hidden_size, latent)

    # One-time parameter prep (hoisted out of the forward path).
    prepared = prepare_params(params)
    prepared = jax.block_until_ready(prepared)

    # With B=40 the wrapper picks TB=32 -> a 2-step grid with a ragged (8-row)
    # last block, exercising multi-step pipelining and masked final writes.
    out = visual_goal_encoder(x, prepared, l2_normalize_goal_embeddings=l2_norm)
    out = jax.block_until_ready(out)

    ref = reference_forward(x, params, l2_normalize_goal_embeddings=l2_norm)
    assert out.shape == (B, latent)
    assert jnp.allclose(out, ref, atol=1e-3, rtol=1e-3), "mismatch vs reference"

    print("KERNEL_OK")
</pallas_src>

<mosaic_0001>
module attributes {stable_mosaic.version = 11 : i64} {
  func.func @_goal_encoder_kernel(%arg0: i32, %arg1: memref<32x32xf32, #tpu.memory_space<vmem>>, %arg2: memref<32x32xbf16, #tpu.memory_space<vmem>>, %arg3: memref<32x32xbf16, #tpu.memory_space<vmem>>, %arg4: memref<32x16xbf16, #tpu.memory_space<vmem>>, %arg5: memref<5x128xf32, #tpu.memory_space<vmem>>, %arg6: memref<32x16xf32, #tpu.memory_space<vmem>>) attributes {dimension_semantics = [#tpu.dimension_semantics<parallel>], iteration_bounds = array<i64: 2>, scalar_prefetch = 0 : i64, scratch_operands = 0 : i64, tpu.core_type = #tpu.core_type<tc>, window_params = [{transform_indices = @transform_0, window_bounds = array<i64: 32, 32>}, {pipeline_mode = #tpu.pipeline_mode<synchronous>, transform_indices = @transform_1, window_bounds = array<i64: 32, 32>}, {pipeline_mode = #tpu.pipeline_mode<synchronous>, transform_indices = @transform_2, window_bounds = array<i64: 32, 32>}, {pipeline_mode = #tpu.pipeline_mode<synchronous>, transform_indices = @transform_3, window_bounds = array<i64: 32, 16>}, {pipeline_mode = #tpu.pipeline_mode<synchronous>, transform_indices = @transform_4, window_bounds = array<i64: 5, 128>}, {transform_indices = @transform_5, window_bounds = array<i64: 32, 16>}]} {
    %c0 = arith.constant 0 : index
    %c0_0 = arith.constant 0 : index
    %0 = vector.load %arg5[%c0, %c0_0] : memref<5x128xf32, #tpu.memory_space<vmem>>, vector<1x32xf32>
    %c1 = arith.constant 1 : index
    %c0_1 = arith.constant 0 : index
    %1 = vector.load %arg5[%c1, %c0_1] : memref<5x128xf32, #tpu.memory_space<vmem>>, vector<1x32xf32>
    %c2 = arith.constant 2 : index
    %c0_2 = arith.constant 0 : index
    %2 = vector.load %arg5[%c2, %c0_2] : memref<5x128xf32, #tpu.memory_space<vmem>>, vector<1x16xf32>
    %c3 = arith.constant 3 : index
    %c0_3 = arith.constant 0 : index
    %3 = vector.load %arg5[%c3, %c0_3] : memref<5x128xf32, #tpu.memory_space<vmem>>, vector<1x16xf32>
    %c4 = arith.constant 4 : index
    %c0_4 = arith.constant 0 : index
    %4 = vector.load %arg5[%c4, %c0_4] : memref<5x128xf32, #tpu.memory_space<vmem>>, vector<1x16xf32>
    %c0_5 = arith.constant 0 : index
    %c0_6 = arith.constant 0 : index
    %5 = vector.load %arg1[%c0_5, %c0_6] : memref<32x32xf32, #tpu.memory_space<vmem>>, vector<32x32xf32>
    %6 = arith.truncf %5 : vector<32x32xf32> to vector<32x32xbf16>
    %c0_7 = arith.constant 0 : index
    %c0_8 = arith.constant 0 : index
    %7 = vector.load %arg2[%c0_7, %c0_8] : memref<32x32xbf16, #tpu.memory_space<vmem>>, vector<32x32xbf16>
    %cst = arith.constant dense<0.000000e+00> : vector<32x32xf32>
    %8 = tpu.matmul %6, %7, %cst {dimension_numbers = #tpu.dot_dimension_numbers<[1], [0], [0], [1], [0, 0, 1, 1], [], []>} : vector<32x32xbf16>, vector<32x32xbf16>, vector<32x32xf32> -> vector<32x32xf32>
    %9 = vector.broadcast %0 : vector<1x32xf32> to vector<32x32xf32>
    %10 = arith.addf %8, %9 : vector<32x32xf32>
    %cst_9 = arith.constant 0.000000e+00 : f32
    %11 = vector.broadcast %cst_9 : f32 to vector<32x32xf32>
    %12 = arith.maximumf %10, %11 : vector<32x32xf32>
    %13 = arith.truncf %12 : vector<32x32xf32> to vector<32x32xbf16>
    %c0_10 = arith.constant 0 : index
    %c0_11 = arith.constant 0 : index
    %14 = vector.load %arg3[%c0_10, %c0_11] : memref<32x32xbf16, #tpu.memory_space<vmem>>, vector<32x32xbf16>
    %cst_12 = arith.constant dense<0.000000e+00> : vector<32x32xf32>
    %15 = tpu.matmul %13, %14, %cst_12 {dimension_numbers = #tpu.dot_dimension_numbers<[1], [0], [0], [1], [0, 0, 1, 1], [], []>} : vector<32x32xbf16>, vector<32x32xbf16>, vector<32x32xf32> -> vector<32x32xf32>
    %16 = vector.broadcast %1 : vector<1x32xf32> to vector<32x32xf32>
    %17 = arith.addf %15, %16 : vector<32x32xf32>
    %cst_13 = arith.constant 0.000000e+00 : f32
    %18 = vector.broadcast %cst_13 : f32 to vector<32x32xf32>
    %19 = arith.maximumf %17, %18 : vector<32x32xf32>
    %20 = arith.truncf %19 : vector<32x32xf32> to vector<32x32xbf16>
    %c0_14 = arith.constant 0 : index
    %c0_15 = arith.constant 0 : index
    %21 = vector.load %arg4[%c0_14, %c0_15] : memref<32x16xbf16, #tpu.memory_space<vmem>>, vector<32x16xbf16>
    %cst_16 = arith.constant dense<0.000000e+00> : vector<32x16xf32>
    %22 = tpu.matmul %20, %21, %cst_16 {dimension_numbers = #tpu.dot_dimension_numbers<[1], [0], [0], [1], [0, 0, 1, 1], [], []>} : vector<32x32xbf16>, vector<32x16xbf16>, vector<32x16xf32> -> vector<32x16xf32>
    %23 = vector.broadcast %2 : vector<1x16xf32> to vector<32x16xf32>
    %24 = arith.addf %22, %23 : vector<32x16xf32>
    %25 = arith.mulf %24, %24 : vector<32x16xf32>
    %cst_17 = arith.constant dense<0.000000e+00> : vector<32xf32>
    %26 = vector.multi_reduction <add>, %25, %cst_17 [1] : vector<32x16xf32> to vector<32xf32>
    %27 = vector.shape_cast %26 : vector<32xf32> to vector<32x1xf32>
    %cst_18 = arith.constant 1.000000e-24 : f32
    %28 = vector.broadcast %cst_18 : f32 to vector<32x1xf32>
    %29 = arith.maximumf %27, %28 : vector<32x1xf32>
    %30 = math.rsqrt %29 : vector<32x1xf32>
    %31 = vector.broadcast %30 : vector<32x1xf32> to vector<32x16xf32>
    %32 = arith.mulf %24, %31 : vector<32x16xf32>
    %cst_19 = arith.constant dense<0.000000e+00> : vector<32xf32>
    %33 = vector.multi_reduction <add>, %32, %cst_19 [1] : vector<32x16xf32> to vector<32xf32>
    %34 = vector.shape_cast %33 : vector<32xf32> to vector<32x1xf32>
    %cst_20 = arith.constant 6.250000e-02 : f32
    %35 = vector.broadcast %cst_20 : f32 to vector<32x1xf32>
    %36 = arith.mulf %34, %35 : vector<32x1xf32>
    %37 = vector.broadcast %36 : vector<32x1xf32> to vector<32x16xf32>
    %38 = arith.subf %32, %37 : vector<32x16xf32>
    %39 = arith.mulf %38, %38 : vector<32x16xf32>
    %cst_21 = arith.constant dense<0.000000e+00> : vector<32xf32>
    %40 = vector.multi_reduction <add>, %39, %cst_21 [1] : vector<32x16xf32> to vector<32xf32>
    %41 = vector.shape_cast %40 : vector<32xf32> to vector<32x1xf32>
    %cst_22 = arith.constant 6.250000e-02 : f32
    %42 = vector.broadcast %cst_22 : f32 to vector<32x1xf32>
    %43 = arith.mulf %41, %42 : vector<32x1xf32>
    %cst_23 = arith.constant 9.99999974E-6 : f32
    %44 = vector.broadcast %cst_23 : f32 to vector<32x1xf32>
    %45 = arith.addf %43, %44 : vector<32x1xf32>
    %46 = math.rsqrt %45 : vector<32x1xf32>
    %47 = vector.broadcast %46 : vector<32x1xf32> to vector<32x16xf32>
    %48 = arith.mulf %38, %47 : vector<32x16xf32>
    %49 = vector.broadcast %3 : vector<1x16xf32> to vector<32x16xf32>
    %50 = arith.mulf %48, %49 : vector<32x16xf32>
    %51 = vector.broadcast %4 : vector<1x16xf32> to vector<32x16xf32>
    %52 = arith.addf %50, %51 : vector<32x16xf32>
    %c0_24 = arith.constant 0 : index
    %c0_25 = arith.constant 0 : index
    %53 = vector.load %arg6[%c0_24, %c0_25] : memref<32x16xf32, #tpu.memory_space<vmem>>, vector<32x16xf32>
    tpu.vector_store %arg6[%c0_24, %c0_25], %52 {strides = array<i32>} : memref<32x16xf32, #tpu.memory_space<vmem>>, vector<32x16xf32>,
    return
  }
  func.func @transform_0(%arg0: i32) -> (i32, i32) {
    %c0_i32 = arith.constant 0 : i32
    %c0_i32_0 = arith.constant 0 : i32
    return %arg0, %c0_i32 : i32, i32
  }
  func.func @transform_1(%arg0: i32) -> (i32, i32) {
    %c0_i32 = arith.constant 0 : i32
    %c0_i32_0 = arith.constant 0 : i32
    %c0_i32_1 = arith.constant 0 : i32
    return %c0_i32, %c0_i32_0 : i32, i32
  }
  func.func @transform_2(%arg0: i32) -> (i32, i32) {
    %c0_i32 = arith.constant 0 : i32
    %c0_i32_0 = arith.constant 0 : i32
    %c0_i32_1 = arith.constant 0 : i32
    return %c0_i32, %c0_i32_0 : i32, i32
  }
  func.func @transform_3(%arg0: i32) -> (i32, i32) {
    %c0_i32 = arith.constant 0 : i32
    %c0_i32_0 = arith.constant 0 : i32
    %c0_i32_1 = arith.constant 0 : i32
    return %c0_i32, %c0_i32_0 : i32, i32
  }
  func.func @transform_4(%arg0: i32) -> (i32, i32) {
    %c0_i32 = arith.constant 0 : i32
    %c0_i32_0 = arith.constant 0 : i32
    %c0_i32_1 = arith.constant 0 : i32
    return %c0_i32, %c0_i32_0 : i32, i32
  }
  func.func @transform_5(%arg0: i32) -> (i32, i32) {
    %c0_i32 = arith.constant 0 : i32
    %c0_i32_0 = arith.constant 0 : i32
    return %arg0, %c0_i32 : i32, i32
  }
}

module attributes {stable_mosaic.version = 11 : i64} {
  func.func @_goal_encoder_kernel(%arg0: i32, %arg1: memref<32x32xf32, #tpu.memory_space<vmem>>, %arg2: memref<32x32xbf16, #tpu.memory_space<vmem>>, %arg3: memref<32x32xbf16, #tpu.memory_space<vmem>>, %arg4: memref<32x16xbf16, #tpu.memory_space<vmem>>, %arg5: memref<5x128xf32, #tpu.memory_space<vmem>>, %arg6: memref<32x16xf32, #tpu.memory_space<vmem>>) attributes {dimension_semantics = [#tpu.dimension_semantics<parallel>], iteration_bounds = array<i64: 2>, scalar_prefetch = 0 : i64, scratch_operands = 0 : i64, tpu.core_type = #tpu.core_type<tc>, window_params = [{transform_indices = @transform_0, window_bounds = array<i64: 32, 32>}, {pipeline_mode = #tpu.pipeline_mode<synchronous>, transform_indices = @transform_1, window_bounds = array<i64: 32, 32>}, {pipeline_mode = #tpu.pipeline_mode<synchronous>, transform_indices = @transform_2, window_bounds = array<i64: 32, 32>}, {pipeline_mode = #tpu.pipeline_mode<synchronous>, transform_indices = @transform_3, window_bounds = array<i64: 32, 16>}, {pipeline_mode = #tpu.pipeline_mode<synchronous>, transform_indices = @transform_4, window_bounds = array<i64: 5, 128>}, {transform_indices = @transform_5, window_bounds = array<i64: 32, 16>}]} {
    %c0 = arith.constant 0 : index
    %c0_0 = arith.constant 0 : index
    %0 = vector.load %arg5[%c0, %c0_0] : memref<5x128xf32, #tpu.memory_space<vmem>>, vector<1x32xf32>
    %c1 = arith.constant 1 : index
    %c0_1 = arith.constant 0 : index
    %1 = vector.load %arg5[%c1, %c0_1] : memref<5x128xf32, #tpu.memory_space<vmem>>, vector<1x32xf32>
    %c2 = arith.constant 2 : index
    %c0_2 = arith.constant 0 : index
    %2 = vector.load %arg5[%c2, %c0_2] : memref<5x128xf32, #tpu.memory_space<vmem>>, vector<1x16xf32>
    %c3 = arith.constant 3 : index
    %c0_3 = arith.constant 0 : index
    %3 = vector.load %arg5[%c3, %c0_3] : memref<5x128xf32, #tpu.memory_space<vmem>>, vector<1x16xf32>
    %c4 = arith.constant 4 : index
    %c0_4 = arith.constant 0 : index
    %4 = vector.load %arg5[%c4, %c0_4] : memref<5x128xf32, #tpu.memory_space<vmem>>, vector<1x16xf32>
    %c0_5 = arith.constant 0 : index
    %c0_6 = arith.constant 0 : index
    %5 = vector.load %arg1[%c0_5, %c0_6] : memref<32x32xf32, #tpu.memory_space<vmem>>, vector<32x32xf32>
    %6 = arith.truncf %5 : vector<32x32xf32> to vector<32x32xbf16>
    %c0_7 = arith.constant 0 : index
    %c0_8 = arith.constant 0 : index
    %7 = vector.load %arg2[%c0_7, %c0_8] : memref<32x32xbf16, #tpu.memory_space<vmem>>, vector<32x32xbf16>
    %cst = arith.constant dense<0.000000e+00> : vector<32x32xf32>
    %8 = tpu.matmul %6, %7, %cst {dimension_numbers = #tpu.dot_dimension_numbers<[1], [0], [0], [1], [0, 0, 1, 1], [], []>} : vector<32x32xbf16>, vector<32x32xbf16>, vector<32x32xf32> -> vector<32x32xf32>
    %9 = vector.broadcast %0 : vector<1x32xf32> to vector<32x32xf32>
    %10 = arith.addf %8, %9 : vector<32x32xf32>
    %cst_9 = arith.constant 0.000000e+00 : f32
    %11 = vector.broadcast %cst_9 : f32 to vector<32x32xf32>
    %12 = arith.maximumf %10, %11 : vector<32x32xf32>
    %13 = arith.truncf %12 : vector<32x32xf32> to vector<32x32xbf16>
    %c0_10 = arith.constant 0 : index
    %c0_11 = arith.constant 0 : index
    %14 = vector.load %arg3[%c0_10, %c0_11] : memref<32x32xbf16, #tpu.memory_space<vmem>>, vector<32x32xbf16>
    %cst_12 = arith.constant dense<0.000000e+00> : vector<32x32xf32>
    %15 = tpu.matmul %13, %14, %cst_12 {dimension_numbers = #tpu.dot_dimension_numbers<[1], [0], [0], [1], [0, 0, 1, 1], [], []>} : vector<32x32xbf16>, vector<32x32xbf16>, vector<32x32xf32> -> vector<32x32xf32>
    %16 = vector.broadcast %1 : vector<1x32xf32> to vector<32x32xf32>
    %17 = arith.addf %15, %16 : vector<32x32xf32>
    %cst_13 = arith.constant 0.000000e+00 : f32
    %18 = vector.broadcast %cst_13 : f32 to vector<32x32xf32>
    %19 = arith.maximumf %17, %18 : vector<32x32xf32>
    %20 = arith.truncf %19 : vector<32x32xf32> to vector<32x32xbf16>
    %c0_14 = arith.constant 0 : index
    %c0_15 = arith.constant 0 : index
    %21 = vector.load %arg4[%c0_14, %c0_15] : memref<32x16xbf16, #tpu.memory_space<vmem>>, vector<32x16xbf16>
    %cst_16 = arith.constant dense<0.000000e+00> : vector<32x16xf32>
    %22 = tpu.matmul %20, %21, %cst_16 {dimension_numbers = #tpu.dot_dimension_numbers<[1], [0], [0], [1], [0, 0, 1, 1], [], []>} : vector<32x32xbf16>, vector<32x16xbf16>, vector<32x16xf32> -> vector<32x16xf32>
    %23 = vector.broadcast %2 : vector<1x16xf32> to vector<32x16xf32>
    %24 = arith.addf %22, %23 : vector<32x16xf32>
    %25 = arith.mulf %24, %24 : vector<32x16xf32>
    %cst_17 = arith.constant dense<0.000000e+00> : vector<32xf32>
    %26 = vector.multi_reduction <add>, %25, %cst_17 [1] : vector<32x16xf32> to vector<32xf32>
    %27 = vector.shape_cast %26 : vector<32xf32> to vector<32x1xf32>
    %cst_18 = arith.constant 1.000000e-24 : f32
    %28 = vector.broadcast %cst_18 : f32 to vector<32x1xf32>
    %29 = arith.maximumf %27, %28 : vector<32x1xf32>
    %30 = math.rsqrt %29 : vector<32x1xf32>
    %31 = vector.broadcast %30 : vector<32x1xf32> to vector<32x16xf32>
    %32 = arith.mulf %24, %31 : vector<32x16xf32>
    %cst_19 = arith.constant dense<0.000000e+00> : vector<32xf32>
    %33 = vector.multi_reduction <add>, %32, %cst_19 [1] : vector<32x16xf32> to vector<32xf32>
    %34 = vector.shape_cast %33 : vector<32xf32> to vector<32x1xf32>
    %cst_20 = arith.constant 6.250000e-02 : f32
    %35 = vector.broadcast %cst_20 : f32 to vector<32x1xf32>
    %36 = arith.mulf %34, %35 : vector<32x1xf32>
    %37 = vector.broadcast %36 : vector<32x1xf32> to vector<32x16xf32>
    %38 = arith.subf %32, %37 : vector<32x16xf32>
    %39 = arith.mulf %38, %38 : vector<32x16xf32>
    %cst_21 = arith.constant dense<0.000000e+00> : vector<32xf32>
    %40 = vector.multi_reduction <add>, %39, %cst_21 [1] : vector<32x16xf32> to vector<32xf32>
    %41 = vector.shape_cast %40 : vector<32xf32> to vector<32x1xf32>
    %cst_22 = arith.constant 6.250000e-02 : f32
    %42 = vector.broadcast %cst_22 : f32 to vector<32x1xf32>
    %43 = arith.mulf %41, %42 : vector<32x1xf32>
    %cst_23 = arith.constant 9.99999974E-6 : f32
    %44 = vector.broadcast %cst_23 : f32 to vector<32x1xf32>
    %45 = arith.addf %43, %44 : vector<32x1xf32>
    %46 = math.rsqrt %45 : vector<32x1xf32>
    %47 = vector.broadcast %46 : vector<32x1xf32> to vector<32x16xf32>
    %48 = arith.mulf %38, %47 : vector<32x16xf32>
    %49 = vector.broadcast %3 : vector<1x16xf32> to vector<32x16xf32>
    %50 = arith.mulf %48, %49 : vector<32x16xf32>
    %51 = vector.broadcast %4 : vector<1x16xf32> to vector<32x16xf32>
    %52 = arith.addf %50, %51 : vector<32x16xf32>
    %c0_24 = arith.constant 0 : index
    %c0_25 = arith.constant 0 : index
    %53 = vector.load %arg6[%c0_24, %c0_25] : memref<32x16xf32, #tpu.memory_space<vmem>>, vector<32x16xf32>
    tpu.vector_store %arg6[%c0_24, %c0_25], %52 {strides = array<i32>} : memref<32x16xf32, #tpu.memory_space<vmem>>, vector<32x16xf32>,
    return
  }
  func.func @transform_0(%arg0: i32) -> (i32, i32) {
    %c0_i32 = arith.constant 0 : i32
    %c0_i32_0 = arith.constant 0 : i32
    return %arg0, %c0_i32 : i32, i32
  }
  func.func @transform_1(%arg0: i32) -> (i32, i32) {
    %c0_i32 = arith.constant 0 : i32
    %c0_i32_0 = arith.constant 0 : i32
    %c0_i32_1 = arith.constant 0 : i32
    return %c0_i32, %c0_i32_0 : i32, i32
  }
  func.func @transform_2(%arg0: i32) -> (i32, i32) {
    %c0_i32 = arith.constant 0 : i32
    %c0_i32_0 = arith.constant 0 : i32
    %c0_i32_1 = arith.constant 0 : i32
    return %c0_i32, %c0_i32_0 : i32, i32
  }
  func.func @transform_3(%arg0: i32) -> (i32, i32) {
    %c0_i32 = arith.constant 0 : i32
    %c0_i32_0 = arith.constant 0 : i32
    %c0_i32_1 = arith.constant 0 : i32
    return %c0_i32, %c0_i32_0 : i32, i32
  }
  func.func @transform_4(%arg0: i32) -> (i32, i32) {
    %c0_i32 = arith.constant 0 : i32
    %c0_i32_0 = arith.constant 0 : i32
    %c0_i32_1 = arith.constant 0 : i32
    return %c0_i32, %c0_i32_0 : i32, i32
  }
  func.func @transform_5(%arg0: i32) -> (i32, i32) {
    %c0_i32 = arith.constant 0 : i32
    %c0_i32_0 = arith.constant 0 : i32
    return %arg0, %c0_i32 : i32, i32
  }
}

</mosaic_0001>

<llo_original>
// kernel: tpu_custom_call.1
$region0: #{tpu_custom_call.1}
  #allocation0 [shape = 'u32[]', space=smem, size = 0x4, offset = 0x4, fixed_abs, tag = 'smem constant byte address 0x4 - core index']
  #allocation1 [shape = 'u32[144,128]{1,0:T(1,128)}', space=vmem, size = 0x12000, scoped, tag = 'internal scratch']
  %s0 = inlined_call_operand.vmem [shape: f32[40,32], index: 0, kind: input, shape index: {}]
  %s1 = inlined_call_operand.vmem [shape: bf16[32,32], index: 1, kind: input, shape index: {}]
  %s2 = inlined_call_operand.vmem [shape: bf16[32,32], index: 2, kind: input, shape index: {}]
  %s3 = inlined_call_operand.vmem [shape: bf16[32,16], index: 3, kind: input, shape index: {}]
  %s4 = inlined_call_operand.vmem [shape: f32[5,128], index: 4, kind: input, shape index: {}]
  %s5 = inlined_call_operand.vmem [shape: f32[40,16], index: 5, kind: output, shape index: {}]
  %s6 = sld [smem:[#allocation0]]
  $region101: #{tpu_custom_call.1} parent=0
    _
  %s8 = ssub.s32 1, %s6
  %s9 = scalar_select 0, %s8, %s6
  $region1: #{tpu_custom_call.1} parent=0
    #allocation2 [shape = 'u8[32768]{0}', space=vmem, size = 0x8000, scoped, tag = 'output window, operand 0']
    loop: start=0, step=1, limit=4
    $region2: #{tpu_custom_call.1} parent=1 // loop_pre_header
      _
    $region3: #{tpu_custom_call.1} parent=1 // loop_header
      %s11 = sphi 0, %s15
      %p12 = scmp.ge.s32.totalorder %s11, 4
      %s21 = sphi 0, %s23
      %s24 = sphi 0, %s21
      %s25 = sphi 0, %s24
      %s41 = sphi 0, %s25
      %s45 = sphi 0, %s45
      %s47 = sphi 0, %s45
      %s48 = sphi 0, %s47
      %s62 = sphi 0, %s48
      %s66 = sphi 0, %s66
      %s68 = sphi 0, %s66
      %s69 = sphi 0, %s68
      %s83 = sphi 0, %s69
      %s87 = sphi 0, %s87
      %s89 = sphi 0, %s87
      %s90 = sphi 0, %s89
      %s104 = sphi 0, %s90
      %s108 = sphi 0, %s108
      %s110 = sphi 0, %s108
      %s111 = sphi 0, %s110
      %s125 = sphi 0, %s111
      %s131 = sphi 0, %s133
      %s134 = sphi 0, %s131
      %s135 = sphi 0, %s134
      %s151 = sphi 0, %s135
    $region4: #{tpu_custom_call.1} parent=1 // loop_header_branch
      %14 = sbr.rel (%p12) target = $region8
    $region5: #{tpu_custom_call.1} parent=1 // loop_body
      %s16 = ssub.s32 %s11, 1
      %s17 = ssub.s32 %s11, 2
      %s18 = sadd.s32 %s11, 1
      %s19 = ssub.s32 %s11, %s18
      %p20 = scmp.eq.s32.totalorder %s19, 0
      %s22 = sadd.s32 %s21, 1
      %s23 = scalar_select %p20, %s21, %s22
      %p26 = pneg %p20
      %p27 = scmp.eq.s32.totalorder %s11, 1
      %p28 = por %p26, %p27
      %p29 = scmp.ne.s32.totalorder %s21, %s24
      %p30 = scmp.eq.s32.totalorder %s11, 0
      %p31 = por %p29, %p30
      %p32 = scmp.ne.s32.totalorder %s21, %s24
      %p33 = scmp.eq.s32.totalorder %s16, 1
      %p34 = por %p32, %p33
      %p35 = scmp.ne.s32.totalorder %s24, %s25
      %p36 = scmp.eq.s32.totalorder %s16, 0
      %p37 = por %p35, %p36
      %p38 = scmp.ne.s32.totalorder %s24, %s25
      %p39 = scmp.eq.s32.totalorder %s17, 1
      %p40 = por %p38, %p39
      %p42 = scmp.ne.s32.totalorder %s25, %s41
      %p43 = scmp.eq.s32.totalorder %s17, 0
      %p44 = por %p42, %p43
      %s46 = sadd.s32 %s45, 1
      %p49 = scmp.eq.s32.totalorder %s11, 1
      %p50 = scmp.ne.s32.totalorder %s45, %s47
      %p51 = scmp.eq.s32.totalorder %s11, 0
      %p52 = por %p50, %p51
      %p53 = scmp.ne.s32.totalorder %s45, %s47
      %p54 = scmp.eq.s32.totalorder %s16, 1
      %p55 = por %p53, %p54
      %p56 = scmp.ne.s32.totalorder %s47, %s48
      %p57 = scmp.eq.s32.totalorder %s16, 0
      %p58 = por %p56, %p57
      %p59 = scmp.ne.s32.totalorder %s47, %s48
      %p60 = scmp.eq.s32.totalorder %s17, 1
      %p61 = por %p59, %p60
      %p63 = scmp.ne.s32.totalorder %s48, %s62
      %p64 = scmp.eq.s32.totalorder %s17, 0
      %p65 = por %p63, %p64
      %s67 = sadd.s32 %s66, 1
      %p70 = scmp.eq.s32.totalorder %s11, 1
      %p71 = scmp.ne.s32.totalorder %s66, %s68
      %p72 = scmp.eq.s32.totalorder %s11, 0
      %p73 = por %p71, %p72
      %p74 = scmp.ne.s32.totalorder %s66, %s68
      %p75 = scmp.eq.s32.totalorder %s16, 1
      %p76 = por %p74, %p75
      %p77 = scmp.ne.s32.totalorder %s68, %s69
      %p78 = scmp.eq.s32.totalorder %s16, 0
      %p79 = por %p77, %p78
      %p80 = scmp.ne.s32.totalorder %s68, %s69
      %p81 = scmp.eq.s32.totalorder %s17, 1
      %p82 = por %p80, %p81
      %p84 = scmp.ne.s32.totalorder %s69, %s83
      %p85 = scmp.eq.s32.totalorder %s17, 0
      %p86 = por %p84, %p85
      %s88 = sadd.s32 %s87, 1
      %p91 = scmp.eq.s32.totalorder %s11, 1
      %p92 = scmp.ne.s32.totalorder %s87, %s89
      %p93 = scmp.eq.s32.totalorder %s11, 0
      %p94 = por %p92, %p93
      %p95 = scmp.ne.s32.totalorder %s87, %s89
      %p96 = scmp.eq.s32.totalorder %s16, 1
      %p97 = por %p95, %p96
      %p98 = scmp.ne.s32.totalorder %s89, %s90
      %p99 = scmp.eq.s32.totalorder %s16, 0
      %p100 = por %p98, %p99
      %p101 = scmp.ne.s32.totalorder %s89, %s90
      %p102 = scmp.eq.s32.totalorder %s17, 1
      %p103 = por %p101, %p102
      %p105 = scmp.ne.s32.totalorder %s90, %s104
      %p106 = scmp.eq.s32.totalorder %s17, 0
      %p107 = por %p105, %p106
      %s109 = sadd.s32 %s108, 1
      %p112 = scmp.eq.s32.totalorder %s11, 1
      %p113 = scmp.ne.s32.totalorder %s108, %s110
      %p114 = scmp.eq.s32.totalorder %s11, 0
      %p115 = por %p113, %p114
      %p116 = scmp.ne.s32.totalorder %s108, %s110
      %p117 = scmp.eq.s32.totalorder %s16, 1
      %p118 = por %p116, %p117
      %p119 = scmp.ne.s32.totalorder %s110, %s111
      %p120 = scmp.eq.s32.totalorder %s16, 0
      %p121 = por %p119, %p120
      %p122 = scmp.ne.s32.totalorder %s110, %s111
      %p123 = scmp.eq.s32.totalorder %s17, 1
      %p124 = por %p122, %p123
      %p126 = scmp.ne.s32.totalorder %s111, %s125
      %p127 = scmp.eq.s32.totalorder %s17, 0
      %p128 = por %p126, %p127
      %s129 = ssub.s32 %s11, %s18
      %p130 = scmp.eq.s32.totalorder %s129, 0
      %s132 = sadd.s32 %s131, 1
      %s133 = scalar_select %p130, %s131, %s132
      %p136 = pneg %p130
      %p137 = scmp.eq.s32.totalorder %s11, 1
      %p138 = por %p136, %p137
      %p139 = scmp.ne.s32.totalorder %s131, %s134
      %p140 = scmp.eq.s32.totalorder %s11, 0
      %p141 = por %p139, %p140
      %p142 = scmp.ne.s32.totalorder %s131, %s134
      %p143 = scmp.eq.s32.totalorder %s16, 1
      %p144 = por %p142, %p143
      %p145 = scmp.ne.s32.totalorder %s134, %s135
      %p146 = scmp.eq.s32.totalorder %s16, 0
      %p147 = por %p145, %p146
      %p148 = scmp.ne.s32.totalorder %s134, %s135
      %p149 = scmp.eq.s32.totalorder %s17, 1
      %p150 = por %p148, %p149
      %p152 = scmp.ne.s32.totalorder %s135, %s151
      %p153 = scmp.eq.s32.totalorder %s17, 0
      %p154 = por %p152, %p153
      %p155 = scmp.le.s32.totalorder 1, %s11
      %p156 = scmp.lt.s32.totalorder %s11, 3
      %p157 = pnand %p155, %p156
      %p158 = pneg %p157
      // Predicated region
      $region9: #{tpu_custom_call.1} parent=5 // pred_check
        _
      $region10: #{tpu_custom_call.1} parent=5 // pred_check_branch
        %160 = sbr.rel (%p157) target = $region12
      $region11: #{tpu_custom_call.1} parent=5 // pred_region
        %s161 = ssub.s32 %s11, 1
        // Predicated region
        $region13: #{tpu_custom_call.1} parent=11 // pred_check
          %p162 = pneg %p58
        $region14: #{tpu_custom_call.1} parent=11 // pred_check_branch
          %164 = sbr.rel (%p162) target = $region16
        $region15: #{tpu_custom_call.1} parent=11 // pred_region
          _
        $region16: #{tpu_custom_call.1} parent=11 // pred_fallthru
          _
        // Predicated region
        $region17: #{tpu_custom_call.1} parent=11 // pred_check
          %p165 = pneg %p79
        $region18: #{tpu_custom_call.1} parent=11 // pred_check_branch
          %167 = sbr.rel (%p165) target = $region20
        $region19: #{tpu_custom_call.1} parent=11 // pred_region
          _
        $region20: #{tpu_custom_call.1} parent=11 // pred_fallthru
          _
        // Predicated region
        $region21: #{tpu_custom_call.1} parent=11 // pred_check
          %p168 = pneg %p100
        $region22: #{tpu_custom_call.1} parent=11 // pred_check_branch
          %170 = sbr.rel (%p168) target = $region24
        $region23: #{tpu_custom_call.1} parent=11 // pred_region
          _
        $region24: #{tpu_custom_call.1} parent=11 // pred_fallthru
          _
        // Predicated region
        $region25: #{tpu_custom_call.1} parent=11 // pred_check
          %p171 = pneg %p121
        $region26: #{tpu_custom_call.1} parent=11 // pred_check_branch
          %173 = sbr.rel (%p171) target = $region28
        $region27: #{tpu_custom_call.1} parent=11 // pred_region
          _
        $region28: #{tpu_custom_call.1} parent=11 // pred_fallthru
          _
      $region12: #{tpu_custom_call.1} parent=5 // pred_fallthru
        _
      %p174 = scmp.lt.s32.totalorder %s11, 2
      // Predicated region
      $region29: #{tpu_custom_call.1} parent=5 // pred_check
        %p175 = pneg %p174
      $region30: #{tpu_custom_call.1} parent=5 // pred_check_branch
        %177 = sbr.rel (%p175) target = $region32
      $region31: #{tpu_custom_call.1} parent=5 // pred_region
        // Predicated region
        $region33: #{tpu_custom_call.1} parent=31 // pred_check
          %p178 = pneg %p31
        $region34: #{tpu_custom_call.1} parent=31 // pred_check_branch
          %180 = sbr.rel (%p178) target = $region36
        $region35: #{tpu_custom_call.1} parent=31 // pred_region
          %s181 = smul.u32 4, %s11
          %s182 = ssub.s32 5, %s181
          %p183 = scmp.lt.s32.totalorder %s182, 4
          %s184 = scalar_select %p183, %s182, 4
          %s185 = smul.u32 128, %s184
          %p186 = scmp.lt.s32.totalorder %s181, 4
          %s187 = scalar_select %p186, %s181, 4
          %s188 = smul.addr %s187, 8
          %s189 = scalar_lea.vmem %s0, %s188
          %s190 = smul.u32 4, %s11
          %s191 = ssub.s32 5, %s190
          %p192 = scmp.lt.s32.totalorder %s191, 4
          %s193 = scalar_select %p192, %s191, 4
          %s194 = smul.u32 128, %s193
        $region36: #{tpu_custom_call.1} parent=31 // pred_fallthru
          _
      $region32: #{tpu_custom_call.1} parent=5 // pred_fallthru
        _
      %p195 = scmp.le.s32.totalorder 1, %s11
      %p196 = scmp.lt.s32.totalorder %s11, 3
      %p197 = pnand %p195, %p196
      %p198 = pneg %p197
      // Predicated region
      $region37: #{tpu_custom_call.1} parent=5 // pred_check
        _
      $region38: #{tpu_custom_call.1} parent=5 // pred_check_branch
        %200 = sbr.rel (%p197) target = $region40
      $region39: #{tpu_custom_call.1} parent=5 // pred_region
        %s201 = ssub.s32 %s11, 1
        %s202 = smul.u32 4, %s16
        %s203 = ssub.s32 5, %s202
        %p204 = scmp.lt.s32.totalorder %s203, 4
        %s205 = scalar_select %p204, %s203, 4
        %s206 = smul.u32 128, %s205
        %p207 = scmp.lt.s32.totalorder %s202, 4
        %s208 = scalar_select %p207, %s202, 4
        %s209 = smul.addr %s208, 8
        %s210 = scalar_lea.vmem %s0, %s209
        %p211 = pneg %p37
        %p212 = pneg %p34
        %p213 = pneg %p58
        %p214 = pneg %p55
        %p215 = pneg %p79
        %p216 = pneg %p76
        %p217 = pneg %p100
        %p218 = pneg %p97
        %p219 = pneg %p121
        %p220 = pneg %p118
        %p221 = pneg %p147
        %p222 = pneg %p144
        %s223 = sand.u32 %s134, 1
        %s224 = sand.u32 %s134, 1
        %s225 = smul.addr %s224, 32
        %s226 = scalar_lea.vmem [#allocation2], %s225
        %s227 = smul.u32 4, %s16
        %s228 = ssub.s32 5, %s227
        %p229 = scmp.lt.s32.totalorder %s228, 4
        %s230 = scalar_select %p229, %s228, 4
        %s231 = smul.u32 128, %s230
        %p232 = scmp.lt.s32.totalorder %s227, 4
        %s233 = scalar_select %p232, %s227, 4
        %s234 = smul.addr %s233, 8
        %s235 = scalar_lea.vmem %s0, %s234
        %s236 = smul.u32 4, %s16
        %s237 = ssub.s32 5, %s236
        %p238 = scmp.lt.s32.totalorder %s237, 4
        %s239 = scalar_select %p238, %s237, 4
        %s240 = smul.u32 128, %s239
        %s241 = smul.u32 4, %s16
        %s242 = ssub.s32 5, %s241
        %p243 = scmp.lt.s32.totalorder %s242, 4
        %s244 = scalar_select %p243, %s242, 4
        %s245 = smul.u32 128, %s244
        %v247 = vld [vmem:[%s4] sm:$0x1]
        %v248 = vld [vmem:[%s4 + $0x1] sm:$0x1]
        %v249 = vld [vmem:[%s4 + $0x2] sm:$0x1]
        %v250 = vld [vmem:[%s4 + $0x3] sm:$0x1]
        %v251 = vld [vmem:[%s4 + $0x4] sm:$0x1]
        %v252 = vld [vmem:[%s235] sm:$0xff]
        %v253 = vld [vmem:[%s235 + $0x8] sm:$0xff]
        %v254 = vld [vmem:[%s235 + $0x10] sm:$0xff]
        %v255 = vld [vmem:[%s235 + $0x18] sm:$0xff]
        %v256 = vpack.c.bf16 %v253, %v252
        %v257 = vpack.c.bf16 %v255, %v254
        %v258 = vld [vmem:[%s1] sm:$0xf]
        %v259 = vld [vmem:[%s1 + $0x4] sm:$0xf]
        %v260 = vld [vmem:[%s1 + $0x8] sm:$0xf]
        %v261 = vld [vmem:[%s1 + $0xc] sm:$0xf]
        %v262 = vlaneseq
        %v263 = vshrl.u32 %v262, 7
        %v264 = vsub.s32 0, %v263
        %v265 = vrot.slane %v247, %v264
        %v270 = vunpack.c.l.b16 %v258
        %v271 = vunpack.c.l.b16 %v259
        %v272 = vunpack.c.l.b16 %v260
        %v273 = vunpack.c.l.b16 %v261
        %v274 = vpack.c.b16 %v271, %v270
        %v275 = vpack.c.b16 %v273, %v272
        %vm278 = vcmask 261120
        %v280 = vsel %vm278, %v256, 0
        %v283 = vsel %vm278, %v257, 0
        %285 = vmatprep.subr.bf16.mxu0 0
        %286 = vmatpush1.bf16.msra.mxu0 %v274
        %287 = vmatprep.subr.bf16.mxu0 0
        %288 = vmatpush1.bf16.msra.mxu0 %v275
        %289 = vmatprep.subr.bf16.mxu0 0
        %290 = vmatpush1.bf16.msra.mxu0 0
        %291 = vmatprep.subr.bf16.mxu0 0
        %292 = vmatpush1.bf16.msra.mxu0 0
        %293 = vmatprep.subr.bf16.mxu0 0
        %294 = vmatpush1.bf16.msra.mxu0 0
        %295 = vmatprep.subr.bf16.mxu0 0
        %296 = vmatpush1.bf16.msra.mxu0 0
        %297 = vmatprep.subr.bf16.mxu0 0
        %298 = vmatpush1.bf16.msra.mxu0 0
        %299 = vmatprep.subr.bf16.mxu0 0
        %300 = vmatpush1.bf16.msra.mxu0 0
        %301 = vmatprep.subr.bf16.mxu0 0
        %302 = vmatpush1.bf16.msra.mxu0 0
        %303 = vmatprep.subr.bf16.mxu0 0
        %304 = vmatpush1.bf16.msra.mxu0 0
        %305 = vmatprep.subr.bf16.mxu0 0
        %306 = vmatpush1.bf16.msra.mxu0 0
        %307 = vmatprep.subr.bf16.mxu0 0
        %308 = vmatpush1.bf16.msra.mxu0 0
        %309 = vmatprep.subr.bf16.mxu0 0
        %310 = vmatpush1.bf16.msra.mxu0 0
        %311 = vmatprep.subr.bf16.mxu0 0
        %312 = vmatpush1.bf16.msra.mxu0 0
        %313 = vmatprep.subr.bf16.mxu0 0
        %314 = vmatpush1.bf16.msra.mxu0 0
        %315 = vmatprep.subr.bf16.mxu0 0
        %316 = vmatpush1.bf16.msra.mxu0 0
        %317 = vmatprep.mubr.bf16.mxu0 0
        %318 = vmatmul.mubr.bf16.gmra.mrb[0].mxu0 %v280
        %v319 = vpop.f32.mrb[0].mxu0
        %v320 = vadd.f32 %v265, %v319
        %v321 = vpop.f32.mrb[0].mxu0
        %v322 = vpop.f32.mrb[0].mxu0
        %v323 = vadd.f32 %v265, %v322
        %v324 = vpop.f32.mrb[0].mxu0
        %325 = vmatprep.mubr.bf16.mxu0 0
        %326 = vmatmul.mubr.bf16.gmra.mrb[0].mxu0 %v283
        %v327 = vpop.f32.mrb[0].mxu0
        %v328 = vadd.f32 %v265, %v327
        %v329 = vpop.f32.mrb[0].mxu0
        %v330 = vpop.f32.mrb[0].mxu0
        %v331 = vadd.f32 %v265, %v330
        %v332 = vpop.f32.mrb[0].mxu0
        %333 = vdwg.mxu0
        %v334 = vmax.f32 %v320, 0.0
        %v335 = vmax.f32 %v323, 0.0
        %v336 = vmax.f32 %v328, 0.0
        %v337 = vmax.f32 %v331, 0.0
        %v338 = vpack.c.bf16 %v335, %v334
        %v339 = vpack.c.bf16 %v337, %v336
        %v340 = vld [vmem:[%s2] sm:$0xf]
        %v341 = vld [vmem:[%s2 + $0x4] sm:$0xf]
        %v342 = vld [vmem:[%s2 + $0x8] sm:$0xf]
        %v343 = vld [vmem:[%s2 + $0xc] sm:$0xf]
        %v344 = vlaneseq
        %v345 = vshrl.u32 %v344, 7
        %v346 = vsub.s32 0, %v345
        %v347 = vrot.slane %v248, %v346
        %v352 = vunpack.c.l.b16 %v340
        %v353 = vunpack.c.l.b16 %v341
        %v354 = vunpack.c.l.b16 %v342
        %v355 = vunpack.c.l.b16 %v343
        %v356 = vpack.c.b16 %v353, %v352
        %v357 = vpack.c.b16 %v355, %v354
        %v361 = vsel %vm278, %v338, 0
        %v364 = vsel %vm278, %v339, 0
        %366 = vmatprep.subr.bf16.mxu0 0
        %367 = vmatpush1.bf16.msra.mxu0 %v356
        %368 = vmatprep.subr.bf16.mxu0 0
        %369 = vmatpush1.bf16.msra.mxu0 %v357
        %370 = vmatprep.subr.bf16.mxu0 0
        %371 = vmatpush1.bf16.msra.mxu0 0
        %372 = vmatprep.subr.bf16.mxu0 0
        %373 = vmatpush1.bf16.msra.mxu0 0
        %374 = vmatprep.subr.bf16.mxu0 0
        %375 = vmatpush1.bf16.msra.mxu0 0
        %376 = vmatprep.subr.bf16.mxu0 0
        %377 = vmatpush1.bf16.msra.mxu0 0
        %378 = vmatprep.subr.bf16.mxu0 0
        %379 = vmatpush1.bf16.msra.mxu0 0
        %380 = vmatprep.subr.bf16.mxu0 0
        %381 = vmatpush1.bf16.msra.mxu0 0
        %382 = vmatprep.subr.bf16.mxu0 0
        %383 = vmatpush1.bf16.msra.mxu0 0
        %384 = vmatprep.subr.bf16.mxu0 0
        %385 = vmatpush1.bf16.msra.mxu0 0
        %386 = vmatprep.subr.bf16.mxu0 0
        %387 = vmatpush1.bf16.msra.mxu0 0
        %388 = vmatprep.subr.bf16.mxu0 0
        %389 = vmatpush1.bf16.msra.mxu0 0
        %390 = vmatprep.subr.bf16.mxu0 0
        %391 = vmatpush1.bf16.msra.mxu0 0
        %392 = vmatprep.subr.bf16.mxu0 0
        %393 = vmatpush1.bf16.msra.mxu0 0
        %394 = vmatprep.subr.bf16.mxu0 0
        %395 = vmatpush1.bf16.msra.mxu0 0
        %396 = vmatprep.subr.bf16.mxu0 0
        %397 = vmatpush1.bf16.msra.mxu0 0
        %398 = vmatprep.mubr.bf16.mxu0 0
        %399 = vmatmul.mubr.bf16.gmra.mrb[0].mxu0 %v361
        %v400 = vpop.f32.mrb[0].mxu0
        %v401 = vadd.f32 %v347, %v400
        %v402 = vpop.f32.mrb[0].mxu0
        %v403 = vpop.f32.mrb[0].mxu0
        %v404 = vadd.f32 %v347, %v403
        %v405 = vpop.f32.mrb[0].mxu0
        %406 = vmatprep.mubr.bf16.mxu0 0
        %407 = vmatmul.mubr.bf16.gmra.mrb[0].mxu0 %v364
        %v408 = vpop.f32.mrb[0].mxu0
        %v409 = vadd.f32 %v347, %v408
        %v410 = vpop.f32.mrb[0].mxu0
        %v411 = vpop.f32.mrb[0].mxu0
        %v412 = vadd.f32 %v347, %v411
        %v413 = vpop.f32.mrb[0].mxu0
        %414 = vdwg.mxu0
        %v415 = vmax.f32 %v401, 0.0
        %v416 = vmax.f32 %v404, 0.0
        %v417 = vmax.f32 %v409, 0.0
        %v418 = vmax.f32 %v412, 0.0
        %v419 = vpack.c.bf16 %v416, %v415
        %v420 = vpack.c.bf16 %v418, %v417
        %v421 = vld [vmem:[%s3] sm:$0xf]
        %v422 = vld [vmem:[%s3 + $0x4] sm:$0xf]
        %v423 = vld [vmem:[%s3 + $0x8] sm:$0xf]
        %v424 = vld [vmem:[%s3 + $0xc] sm:$0xf]
        %v425 = vlaneseq
        %v426 = vshrl.u32 %v425, 7
        %v427 = vsub.s32 0, %v426
        %v428 = vrot.slane %v249, %v427
        %v433 = vunpack.c.l.b16 %v421
        %v434 = vunpack.c.l.b16 %v422
        %v435 = vunpack.c.l.b16 %v423
        %v436 = vunpack.c.l.b16 %v424
        %v437 = vpack.c.b16 %v434, %v433
        %v438 = vpack.c.b16 %v436, %v435
        %v442 = vsel %vm278, %v419, 0
        %v445 = vsel %vm278, %v420, 0
        %447 = vmatprep.subr.bf16.mxu0 0
        %448 = vmatpush1.bf16.msra.mxu0 %v437
        %449 = vmatprep.subr.bf16.mxu0 0
        %450 = vmatpush1.bf16.msra.mxu0 %v438
        %451 = vmatprep.subr.bf16.mxu0 0
        %452 = vmatpush1.bf16.msra.mxu0 0
        %453 = vmatprep.subr.bf16.mxu0 0
        %454 = vmatpush1.bf16.msra.mxu0 0
        %455 = vmatprep.subr.bf16.mxu0 0
        %456 = vmatpush1.bf16.msra.mxu0 0
        %457 = vmatprep.subr.bf16.mxu0 0
        %458 = vmatpush1.bf16.msra.mxu0 0
        %459 = vmatprep.subr.bf16.mxu0 0
        %460 = vmatpush1.bf16.msra.mxu0 0
        %461 = vmatprep.subr.bf16.mxu0 0
        %462 = vmatpush1.bf16.msra.mxu0 0
        %463 = vmatprep.subr.bf16.mxu0 0
        %464 = vmatpush1.bf16.msra.mxu0 0
        %465 = vmatprep.subr.bf16.mxu0 0
        %466 = vmatpush1.bf16.msra.mxu0 0
        %467 = vmatprep.subr.bf16.mxu0 0
        %468 = vmatpush1.bf16.msra.mxu0 0
        %469 = vmatprep.subr.bf16.mxu0 0
        %470 = vmatpush1.bf16.msra.mxu0 0
        %471 = vmatprep.subr.bf16.mxu0 0
        %472 = vmatpush1.bf16.msra.mxu0 0
        %473 = vmatprep.subr.bf16.mxu0 0
        %474 = vmatpush1.bf16.msra.mxu0 0
        %475 = vmatprep.subr.bf16.mxu0 0
        %476 = vmatpush1.bf16.msra.mxu0 0
        %477 = vmatprep.subr.bf16.mxu0 0
        %478 = vmatpush1.bf16.msra.mxu0 0
        %479 = vmatprep.mubr.bf16.mxu0 0
        %480 = vmatmul.mubr.bf16.gmra.mrb[0].mxu0 %v442
        %v481 = vpop.f32.mrb[0].mxu0
        %v482 = vadd.f32 %v428, %v481
        %v483 = vpop.f32.mrb[0].mxu0
        %v484 = vpop.f32.mrb[0].mxu0
        %v485 = vadd.f32 %v428, %v484
        %v486 = vpop.f32.mrb[0].mxu0
        %487 = vmatprep.mubr.bf16.mxu0 0
        %488 = vmatmul.mubr.bf16.gmra.mrb[0].mxu0 %v445
        %v489 = vpop.f32.mrb[0].mxu0
        %v490 = vadd.f32 %v428, %v489
        %v491 = vpop.f32.mrb[0].mxu0
        %v492 = vpop.f32.mrb[0].mxu0
        %v493 = vadd.f32 %v428, %v492
        %v494 = vpop.f32.mrb[0].mxu0
        %495 = vdwg.mxu0
        %v496 = vmul.f32 %v482, %v482
        %v497 = vmul.f32 %v485, %v485
        %v498 = vmul.f32 %v490, %v490
        %v499 = vmul.f32 %v493, %v493
        %vm500 = vcmask 130048
        %v501 = vsel %vm500, %v496, 0.0
        %502 = vadd.xlane.f32.xlu0 %v501
        %v503 = vpop.xlane.xlu0 %502
        %v504 = vsel %vm500, %v497, 0.0
        %505 = vadd.xlane.f32.xlu0 %v504
        %v506 = vpop.xlane.xlu0 %505
        %v507 = vsel %vm500, %v498, 0.0
        %508 = vadd.xlane.f32.xlu0 %v507
        %v509 = vpop.xlane.xlu0 %508
        %v510 = vsel %vm500, %v499, 0.0
        %511 = vadd.xlane.f32.xlu0 %v510
        %v512 = vpop.xlane.xlu0 %511
        %v513 = vmax.f32 %v503, 1e-24
        %v514 = vmax.f32 %v506, 1e-24
        %v515 = vmax.f32 %v509, 1e-24
        %v516 = vmax.f32 %v512, 1e-24
        %v517 = vrsqrt.pop %v513
        %v518 = vrsqrt.pop %v514
        %v519 = vrsqrt.pop %v515
        %v520 = vrsqrt.pop %v516
        %v521 = vmul.f32 %v482, %v517
        %v522 = vmul.f32 %v485, %v518
        %v523 = vmul.f32 %v490, %v519
        %v524 = vmul.f32 %v493, %v520
        %v525 = vsel %vm500, %v521, 0.0
        %526 = vadd.xlane.f32.xlu0 %v525
        %v527 = vpop.xlane.xlu0 %526
        %v528 = vsel %vm500, %v522, 0.0
        %529 = vadd.xlane.f32.xlu0 %v528
        %v530 = vpop.xlane.xlu0 %529
        %v531 = vsel %vm500, %v523, 0.0
        %532 = vadd.xlane.f32.xlu0 %v531
        %v533 = vpop.xlane.xlu0 %532
        %v534 = vsel %vm500, %v524, 0.0
        %535 = vadd.xlane.f32.xlu0 %v534
        %v536 = vpop.xlane.xlu0 %535
        %v537 = vmul.f32 %v527, 0.0625
        %v538 = vmul.f32 %v530, 0.0625
        %v539 = vmul.f32 %v533, 0.0625
        %v540 = vmul.f32 %v536, 0.0625
        %v541 = vsub.f32 %v521, %v537
        %v542 = vsub.f32 %v522, %v538
        %v543 = vsub.f32 %v523, %v539
        %v544 = vsub.f32 %v524, %v540
        %v545 = vmul.f32 %v541, %v541
        %v546 = vmul.f32 %v542, %v542
        %v547 = vmul.f32 %v543, %v543
        %v548 = vmul.f32 %v544, %v544
        %v549 = vsel %vm500, %v545, 0.0
        %550 = vadd.xlane.f32.xlu0 %v549
        %v551 = vpop.xlane.xlu0 %550
        %v552 = vsel %vm500, %v546, 0.0
        %553 = vadd.xlane.f32.xlu0 %v552
        %v554 = vpop.xlane.xlu0 %553
        %v555 = vsel %vm500, %v547, 0.0
        %556 = vadd.xlane.f32.xlu0 %v555
        %v557 = vpop.xlane.xlu0 %556
        %v558 = vsel %vm500, %v548, 0.0
        %559 = vadd.xlane.f32.xlu0 %v558
        %v560 = vpop.xlane.xlu0 %559
        %v561 = vmul.f32 %v551, 0.0625
        %v562 = vmul.f32 %v554, 0.0625
        %v563 = vmul.f32 %v557, 0.0625
        %v564 = vmul.f32 %v560, 0.0625
        %v565 = vadd.f32 %v561, 1e-05
        %v566 = vadd.f32 %v562, 1e-05
        %v567 = vadd.f32 %v563, 1e-05
        %v568 = vadd.f32 %v564, 1e-05
        %v569 = vrsqrt.pop %v565
        %v570 = vrsqrt.pop %v566
        %v571 = vrsqrt.pop %v567
        %v572 = vrsqrt.pop %v568
        %v573 = vmul.f32 %v541, %v569
        %v574 = vmul.f32 %v542, %v570
        %v575 = vmul.f32 %v543, %v571
        %v576 = vmul.f32 %v544, %v572
        %v577 = vlaneseq
        %v578 = vshrl.u32 %v577, 7
        %v579 = vsub.s32 0, %v578
        %v580 = vrot.slane %v250, %v579
        %v581 = vmul.f32 %v573, %v580
        %v582 = vmul.f32 %v574, %v580
        %v583 = vmul.f32 %v575, %v580
        %v584 = vmul.f32 %v576, %v580
        %v585 = vlaneseq
        %v586 = vshrl.u32 %v585, 7
        %v587 = vsub.s32 0, %v586
        %v588 = vrot.slane %v251, %v587
        %v589 = vadd.f32 %v581, %v588
        %v590 = vadd.f32 %v582, %v588
        %v591 = vadd.f32 %v583, %v588
        %v592 = vadd.f32 %v584, %v588
        %593 = vst.msk [vmem:[%s226] sm:$0xff] %vm500, %v589
        %594 = vst.msk [vmem:[%s226 + $0x8] sm:$0xff] %vm500, %v590
        %595 = vst.msk [vmem:[%s226 + $0x10] sm:$0xff] %vm500, %v591
        %596 = vst.msk [vmem:[%s226 + $0x18] sm:$0xff] %vm500, %v592
        %s597 = sand.u32 %s134, 1
        %s598 = sand.u32 %s134, 1
        %s599 = smul.addr %s598, 32
        %s600 = scalar_lea.vmem [#allocation2], %s599
        // Predicated region
        $region41: #{tpu_custom_call.1} parent=39 // pred_check
          %p601 = pneg %p144
        $region42: #{tpu_custom_call.1} parent=39 // pred_check_branch
          %603 = sbr.rel (%p601) target = $region44
        $region43: #{tpu_custom_call.1} parent=39 // pred_region
          %s604 = smul.u32 4, %s16
          %s605 = ssub.s32 5, %s604
          %p606 = scmp.lt.s32.totalorder %s605, 4
          %s607 = scalar_select %p606, %s605, 4
          %s608 = smul.u32 128, %s607
          %p609 = scmp.ne.s32.totalorder 0, %s608
          %s610 = smul.addr %s604, 8
          %s611 = scalar_lea.vmem %s5, %s610
          // Predicated region
          $region45: #{tpu_custom_call.1} parent=43 // pred_check
            %p612 = pneg %p609
          $region46: #{tpu_custom_call.1} parent=43 // pred_check_branch
            %614 = sbr.rel (%p612) target = $region48
          $region47: #{tpu_custom_call.1} parent=43 // pred_region
            // Predicated region
            $region49: #{tpu_custom_call.1} parent=47 // pred_check
              _
            $region50: #{tpu_custom_call.1} parent=47 // pred_check_branch
              %616 = sbr.rel (0) target = $region52
            $region51: #{tpu_custom_call.1} parent=47 // pred_region
              // Predicated region
              $region71: #{tpu_custom_call.1} parent=51 // pred_check
                _
              $region72: #{tpu_custom_call.1} parent=51 // pred_check_branch
                %671 = sbr.rel (0) target = $region74
              $region73: #{tpu_custom_call.1} parent=51 // pred_region
                %s672 = sshrl.u32 %s607, 2
                // While loop
                $region75: #{tpu_custom_call.1} parent=73 // loop_pre_header
                  _
                $region76: #{tpu_custom_call.1} parent=73 // loop_header
                  %s674 = sphi 0, %s676
                  %p675 = scmp.ge.s32.totalorder %s674, %s672
                  %s679 = sphi 0, %s692
                  %s680 = sphi %s600, %s695
                  %s681 = sphi %s611, %s696
                $region77: #{tpu_custom_call.1} parent=73 // loop_header_branch
                  %678 = sbr.rel (%p675) target = $region81
                $region78: #{tpu_custom_call.1} parent=73 // loop_body
                  %v682 = vld [vmem:[%s680] sm:$0xff]
                  %683 = vst [vmem:[%s681] sm:$0xff] %v682
                  %v684 = vld [vmem:[%s680 + $0x8] sm:$0xff]
                  %685 = vst [vmem:[%s681 + $0x8] sm:$0xff] %v684
                  %v686 = vld [vmem:[%s680 + $0x10] sm:$0xff]
                  %687 = vst [vmem:[%s681 + $0x10] sm:$0xff] %v686
                  %v688 = vld [vmem:[%s680 + $0x18] sm:$0xff]
                  %689 = vst [vmem:[%s681 + $0x18] sm:$0xff] %v688
                  %s690 = sadd.s32 1, %s679
                  %p691 = scmp.ge.s32.totalorder %s690, %s672
                  %s692 = scalar_select %p691, 0, %s690
                  %s693 = smul.u32 %s692, 32
                  %s694 = smul.u32 %s692, 32
                  %s695 = scalar_lea.vmem %s600, %s693 [#allocation2]
                  %s696 = scalar_lea.vmem %s611, %s694
                $region79: #{tpu_custom_call.1} parent=73 // loop_footer
                  %s676 = sadd.s32 %s674, 1
                $region80: #{tpu_custom_call.1} parent=73 // loop_footer_branch
                  %673 = sbr.rel target = $region76
                $region81: #{tpu_custom_call.1} parent=73 // loop_exit
                  _
                %s697 = sshrl.u32 %s607, 2
                %s698 = sand.u32 %s607, 3
                %s699 = smul.u32 %s697, 4
                %s700 = smul.u32 8, %s699
                %s701 = scalar_lea.vmem %s600, %s700 [#allocation2]
                %s702 = smul.u32 8, %s699
                %s703 = scalar_lea.vmem %s611, %s702
                // While loop
                $region82: #{tpu_custom_call.1} parent=73 // loop_pre_header
                  _
                $region83: #{tpu_custom_call.1} parent=73 // loop_header
                  %s705 = sphi 0, %s707
                  %p706 = scmp.ge.s32.totalorder %s705, %s698
                  %s710 = sphi 0, %s717
                  %s711 = sphi %s701, %s720
                  %s712 = sphi %s703, %s721
                $region84: #{tpu_custom_call.1} parent=73 // loop_header_branch
                  %709 = sbr.rel (%p706) target = $region88
                $region85: #{tpu_custom_call.1} parent=73 // loop_body
                  %v713 = vld [vmem:[%s711] sm:$0xff]
                  %714 = vst [vmem:[%s712] sm:$0xff] %v713
                  %s715 = sadd.s32 1, %s710
                  %p716 = scmp.ge.s32.totalorder %s715, %s698
                  %s717 = scalar_select %p716, 0, %s715
                  %s718 = smul.u32 %s717, 8
                  %s719 = smul.u32 %s717, 8
                  %s720 = scalar_lea.vmem %s701, %s718 [#allocation2]
                  %s721 = scalar_lea.vmem %s703, %s719
                $region86: #{tpu_custom_call.1} parent=73 // loop_footer
                  %s707 = sadd.s32 %s705, 1
                $region87: #{tpu_custom_call.1} parent=73 // loop_footer_branch
                  %704 = sbr.rel target = $region83
                $region88: #{tpu_custom_call.1} parent=73 // loop_exit
                  _
              $region74: #{tpu_custom_call.1} parent=51 // pred_fallthru
                _
              // Predicated region
              $region89: #{tpu_custom_call.1} parent=51 // pred_check
                _
              $region90: #{tpu_custom_call.1} parent=51 // pred_check_branch
                %723 = sbr.rel target = $region92
              $region91: #{tpu_custom_call.1} parent=51 // pred_region
                _
              $region92: #{tpu_custom_call.1} parent=51 // pred_fallthru
                _
            $region52: #{tpu_custom_call.1} parent=47 // pred_fallthru
              _
            // Predicated region
            $region53: #{tpu_custom_call.1} parent=47 // pred_check
              _
            $region54: #{tpu_custom_call.1} parent=47 // pred_check_branch
              %618 = sbr.rel target = $region56
            $region55: #{tpu_custom_call.1} parent=47 // pred_region
              %s620 = sshrl.u32 %s607, 2
              // While loop
              $region57: #{tpu_custom_call.1} parent=55 // loop_pre_header
                _
              $region58: #{tpu_custom_call.1} parent=55 // loop_header
                %s622 = sphi 0, %s624
                %p623 = scmp.ge.s32.totalorder %s622, %s620
                %s627 = sphi 0, %s640
                %s628 = sphi %s600, %s643
                %s629 = sphi %s611, %s644
              $region59: #{tpu_custom_call.1} parent=55 // loop_header_branch
                %626 = sbr.rel (%p623) target = $region63
              $region60: #{tpu_custom_call.1} parent=55 // loop_body
                %v630 = vld [vmem:[%s628] sm:$0xff]
                %631 = vst [vmem:[%s629] sm:$0xff] %v630
                %v632 = vld [vmem:[%s628 + $0x8] sm:$0xff]
                %633 = vst [vmem:[%s629 + $0x8] sm:$0xff] %v632
                %v634 = vld [vmem:[%s628 + $0x10] sm:$0xff]
                %635 = vst [vmem:[%s629 + $0x10] sm:$0xff] %v634
                %v636 = vld [vmem:[%s628 + $0x18] sm:$0xff]
                %637 = vst [vmem:[%s629 + $0x18] sm:$0xff] %v636
                %s638 = sadd.s32 1, %s627
                %p639 = scmp.ge.s32.totalorder %s638, %s620
                %s640 = scalar_select %p639, 0, %s638
                %s641 = smul.u32 %s640, 32
                %s642 = smul.u32 %s640, 32
                %s643 = scalar_lea.vmem %s600, %s641 [#allocation2]
                %s644 = scalar_lea.vmem %s611, %s642
              $region61: #{tpu_custom_call.1} parent=55 // loop_footer
                %s624 = sadd.s32 %s622, 1
              $region62: #{tpu_custom_call.1} parent=55 // loop_footer_branch
                %621 = sbr.rel target = $region58
              $region63: #{tpu_custom_call.1} parent=55 // loop_exit
                _
              %s645 = sshrl.u32 %s607, 2
              %s646 = sand.u32 %s607, 3
              %s647 = smul.u32 %s645, 4
              %s648 = smul.u32 8, %s647
              %s649 = scalar_lea.vmem %s600, %s648 [#allocation2]
              %s650 = smul.u32 8, %s647
              %s651 = scalar_lea.vmem %s611, %s650
              // While loop
              $region64: #{tpu_custom_call.1} parent=55 // loop_pre_header
                _
              $region65: #{tpu_custom_call.1} parent=55 // loop_header
                %s653 = sphi 0, %s655
                %p654 = scmp.ge.s32.totalorder %s653, %s646
                %s658 = sphi 0, %s665
                %s659 = sphi %s649, %s668
                %s660 = sphi %s651, %s669
              $region66: #{tpu_custom_call.1} parent=55 // loop_header_branch
                %657 = sbr.rel (%p654) target = $region70
              $region67: #{tpu_custom_call.1} parent=55 // loop_body
                %v661 = vld [vmem:[%s659] sm:$0xff]
                %662 = vst [vmem:[%s660] sm:$0xff] %v661
                %s663 = sadd.s32 1, %s658
                %p664 = scmp.ge.s32.totalorder %s663, %s646
                %s665 = scalar_select %p664, 0, %s663
                %s666 = smul.u32 %s665, 8
                %s667 = smul.u32 %s665, 8
                %s668 = scalar_lea.vmem %s649, %s666 [#allocation2]
                %s669 = scalar_lea.vmem %s651, %s667
              $region68: #{tpu_custom_call.1} parent=55 // loop_footer
                %s655 = sadd.s32 %s653, 1
              $region69: #{tpu_custom_call.1} parent=55 // loop_footer_branch
                %652 = sbr.rel target = $region65
              $region70: #{tpu_custom_call.1} parent=55 // loop_exit
                _
            $region56: #{tpu_custom_call.1} parent=47 // pred_fallthru
              _
          $region48: #{tpu_custom_call.1} parent=43 // pred_fallthru
            _
          %724 = vnop
        $region44: #{tpu_custom_call.1} parent=39 // pred_fallthru
          _
      $region40: #{tpu_custom_call.1} parent=5 // pred_fallthru
        _
      %p725 = scmp.le.s32.totalorder 2, %s11
      // Predicated region
      $region93: #{tpu_custom_call.1} parent=5 // pred_check
        %p726 = pneg %p725
      $region94: #{tpu_custom_call.1} parent=5 // pred_check_branch
        %728 = sbr.rel (%p726) target = $region96
      $region95: #{tpu_custom_call.1} parent=5 // pred_region
        %s729 = ssub.s32 %s11, 2
        // Predicated region
        $region97: #{tpu_custom_call.1} parent=95 // pred_check
          %p730 = pneg %p150
        $region98: #{tpu_custom_call.1} parent=95 // pred_check_branch
          %732 = sbr.rel (%p730) target = $region100
        $region99: #{tpu_custom_call.1} parent=95 // pred_region
          %s733 = sand.u32 %s135, 1
          %s734 = sand.u32 %s135, 1
          %s735 = smul.addr %s734, 32
          %s736 = scalar_lea.vmem [#allocation2], %s735
        $region100: #{tpu_custom_call.1} parent=95 // pred_fallthru
          _
      $region96: #{tpu_custom_call.1} parent=5 // pred_fallthru
        _
    $region6: #{tpu_custom_call.1} parent=1 // loop_footer
      %s15 = sadd.s32 1, %s11
    $region7: #{tpu_custom_call.1} parent=1 // loop_footer_branch
      %10 = sbr.rel target = $region3
    $region8: #{tpu_custom_call.1} parent=1 // loop_exit
      _

// kernel: tpu_custom_call.1
$region0: #{tpu_custom_call.1}
  #allocation0 [shape = 'u32[]', space=smem, size = 0x4, offset = 0x4, fixed_abs, tag = 'smem constant byte address 0x4 - core index']
  #allocation1 [shape = 'u32[144,128]{1,0:T(1,128)}', space=vmem, size = 0x12000, scoped, tag = 'internal scratch']
  %s0 = inlined_call_operand.vmem [shape: f32[40,32], index: 0, kind: input, shape index: {}]
  %s1 = inlined_call_operand.vmem [shape: bf16[32,32], index: 1, kind: input, shape index: {}]
  %s2 = inlined_call_operand.vmem [shape: bf16[32,32], index: 2, kind: input, shape index: {}]
  %s3 = inlined_call_operand.vmem [shape: bf16[32,16], index: 3, kind: input, shape index: {}]
  %s4 = inlined_call_operand.vmem [shape: f32[5,128], index: 4, kind: input, shape index: {}]
  %s5 = inlined_call_operand.vmem [shape: f32[40,16], index: 5, kind: output, shape index: {}]
  %s6 = sld [smem:[#allocation0]]
  $region101: #{tpu_custom_call.1} parent=0
    _
  %s8 = ssub.s32 1, %s6
  %s9 = scalar_select 0, %s8, %s6
  $region1: #{tpu_custom_call.1} parent=0
    #allocation2 [shape = 'u8[32768]{0}', space=vmem, size = 0x8000, scoped, tag = 'output window, operand 0']
    loop: start=0, step=1, limit=4
    $region2: #{tpu_custom_call.1} parent=1 // loop_pre_header
      _
    $region3: #{tpu_custom_call.1} parent=1 // loop_header
      %s11 = sphi 0, %s15
      %p12 = scmp.ge.s32.totalorder %s11, 4
      %s21 = sphi 0, %s23
      %s24 = sphi 0, %s21
      %s25 = sphi 0, %s24
      %s41 = sphi 0, %s25
      %s45 = sphi 0, %s45
      %s47 = sphi 0, %s45
      %s48 = sphi 0, %s47
      %s62 = sphi 0, %s48
      %s66 = sphi 0, %s66
      %s68 = sphi 0, %s66
      %s69 = sphi 0, %s68
      %s83 = sphi 0, %s69
      %s87 = sphi 0, %s87
      %s89 = sphi 0, %s87
      %s90 = sphi 0, %s89
      %s104 = sphi 0, %s90
      %s108 = sphi 0, %s108
      %s110 = sphi 0, %s108
      %s111 = sphi 0, %s110
      %s125 = sphi 0, %s111
      %s131 = sphi 0, %s133
      %s134 = sphi 0, %s131
      %s135 = sphi 0, %s134
      %s151 = sphi 0, %s135
    $region4: #{tpu_custom_call.1} parent=1 // loop_header_branch
      %14 = sbr.rel (%p12) target = $region8
    $region5: #{tpu_custom_call.1} parent=1 // loop_body
      %s16 = ssub.s32 %s11, 1
      %s17 = ssub.s32 %s11, 2
      %s18 = sadd.s32 %s11, 1
      %s19 = ssub.s32 %s11, %s18
      %p20 = scmp.eq.s32.totalorder %s19, 0
      %s22 = sadd.s32 %s21, 1
      %s23 = scalar_select %p20, %s21, %s22
      %p26 = pneg %p20
      %p27 = scmp.eq.s32.totalorder %s11, 1
      %p28 = por %p26, %p27
      %p29 = scmp.ne.s32.totalorder %s21, %s24
      %p30 = scmp.eq.s32.totalorder %s11, 0
      %p31 = por %p29, %p30
      %p32 = scmp.ne.s32.totalorder %s21, %s24
      %p33 = scmp.eq.s32.totalorder %s16, 1
      %p34 = por %p32, %p33
      %p35 = scmp.ne.s32.totalorder %s24, %s25
      %p36 = scmp.eq.s32.totalorder %s16, 0
      %p37 = por %p35, %p36
      %p38 = scmp.ne.s32.totalorder %s24, %s25
      %p39 = scmp.eq.s32.totalorder %s17, 1
      %p40 = por %p38, %p39
      %p42 = scmp.ne.s32.totalorder %s25, %s41
      %p43 = scmp.eq.s32.totalorder %s17, 0
      %p44 = por %p42, %p43
      %s46 = sadd.s32 %s45, 1
      %p49 = scmp.eq.s32.totalorder %s11, 1
      %p50 = scmp.ne.s32.totalorder %s45, %s47
      %p51 = scmp.eq.s32.totalorder %s11, 0
      %p52 = por %p50, %p51
      %p53 = scmp.ne.s32.totalorder %s45, %s47
      %p54 = scmp.eq.s32.totalorder %s16, 1
      %p55 = por %p53, %p54
      %p56 = scmp.ne.s32.totalorder %s47, %s48
      %p57 = scmp.eq.s32.totalorder %s16, 0
      %p58 = por %p56, %p57
      %p59 = scmp.ne.s32.totalorder %s47, %s48
      %p60 = scmp.eq.s32.totalorder %s17, 1
      %p61 = por %p59, %p60
      %p63 = scmp.ne.s32.totalorder %s48, %s62
      %p64 = scmp.eq.s32.totalorder %s17, 0
      %p65 = por %p63, %p64
      %s67 = sadd.s32 %s66, 1
      %p70 = scmp.eq.s32.totalorder %s11, 1
      %p71 = scmp.ne.s32.totalorder %s66, %s68
      %p72 = scmp.eq.s32.totalorder %s11, 0
      %p73 = por %p71, %p72
      %p74 = scmp.ne.s32.totalorder %s66, %s68
      %p75 = scmp.eq.s32.totalorder %s16, 1
      %p76 = por %p74, %p75
      %p77 = scmp.ne.s32.totalorder %s68, %s69
      %p78 = scmp.eq.s32.totalorder %s16, 0
      %p79 = por %p77, %p78
      %p80 = scmp.ne.s32.totalorder %s68, %s69
      %p81 = scmp.eq.s32.totalorder %s17, 1
      %p82 = por %p80, %p81
      %p84 = scmp.ne.s32.totalorder %s69, %s83
      %p85 = scmp.eq.s32.totalorder %s17, 0
      %p86 = por %p84, %p85
      %s88 = sadd.s32 %s87, 1
      %p91 = scmp.eq.s32.totalorder %s11, 1
      %p92 = scmp.ne.s32.totalorder %s87, %s89
      %p93 = scmp.eq.s32.totalorder %s11, 0
      %p94 = por %p92, %p93
      %p95 = scmp.ne.s32.totalorder %s87, %s89
      %p96 = scmp.eq.s32.totalorder %s16, 1
      %p97 = por %p95, %p96
      %p98 = scmp.ne.s32.totalorder %s89, %s90
      %p99 = scmp.eq.s32.totalorder %s16, 0
      %p100 = por %p98, %p99
      %p101 = scmp.ne.s32.totalorder %s89, %s90
      %p102 = scmp.eq.s32.totalorder %s17, 1
      %p103 = por %p101, %p102
      %p105 = scmp.ne.s32.totalorder %s90, %s104
      %p106 = scmp.eq.s32.totalorder %s17, 0
      %p107 = por %p105, %p106
      %s109 = sadd.s32 %s108, 1
      %p112 = scmp.eq.s32.totalorder %s11, 1
      %p113 = scmp.ne.s32.totalorder %s108, %s110
      %p114 = scmp.eq.s32.totalorder %s11, 0
      %p115 = por %p113, %p114
      %p116 = scmp.ne.s32.totalorder %s108, %s110
      %p117 = scmp.eq.s32.totalorder %s16, 1
      %p118 = por %p116, %p117
      %p119 = scmp.ne.s32.totalorder %s110, %s111
      %p120 = scmp.eq.s32.totalorder %s16, 0
      %p121 = por %p119, %p120
      %p122 = scmp.ne.s32.totalorder %s110, %s111
      %p123 = scmp.eq.s32.totalorder %s17, 1
      %p124 = por %p122, %p123
      %p126 = scmp.ne.s32.totalorder %s111, %s125
      %p127 = scmp.eq.s32.totalorder %s17, 0
      %p128 = por %p126, %p127
      %s129 = ssub.s32 %s11, %s18
      %p130 = scmp.eq.s32.totalorder %s129, 0
      %s132 = sadd.s32 %s131, 1
      %s133 = scalar_select %p130, %s131, %s132
      %p136 = pneg %p130
      %p137 = scmp.eq.s32.totalorder %s11, 1
      %p138 = por %p136, %p137
      %p139 = scmp.ne.s32.totalorder %s131, %s134
      %p140 = scmp.eq.s32.totalorder %s11, 0
      %p141 = por %p139, %p140
      %p142 = scmp.ne.s32.totalorder %s131, %s134
      %p143 = scmp.eq.s32.totalorder %s16, 1
      %p144 = por %p142, %p143
      %p145 = scmp.ne.s32.totalorder %s134, %s135
      %p146 = scmp.eq.s32.totalorder %s16, 0
      %p147 = por %p145, %p146
      %p148 = scmp.ne.s32.totalorder %s134, %s135
      %p149 = scmp.eq.s32.totalorder %s17, 1
      %p150 = por %p148, %p149
      %p152 = scmp.ne.s32.totalorder %s135, %s151
      %p153 = scmp.eq.s32.totalorder %s17, 0
      %p154 = por %p152, %p153
      %p155 = scmp.le.s32.totalorder 1, %s11
      %p156 = scmp.lt.s32.totalorder %s11, 3
      %p157 = pnand %p155, %p156
      %p158 = pneg %p157
      // Predicated region
      $region9: #{tpu_custom_call.1} parent=5 // pred_check
        _
      $region10: #{tpu_custom_call.1} parent=5 // pred_check_branch
        %160 = sbr.rel (%p157) target = $region12
      $region11: #{tpu_custom_call.1} parent=5 // pred_region
        %s161 = ssub.s32 %s11, 1
        // Predicated region
        $region13: #{tpu_custom_call.1} parent=11 // pred_check
          %p162 = pneg %p58
        $region14: #{tpu_custom_call.1} parent=11 // pred_check_branch
          %164 = sbr.rel (%p162) target = $region16
        $region15: #{tpu_custom_call.1} parent=11 // pred_region
          _
        $region16: #{tpu_custom_call.1} parent=11 // pred_fallthru
          _
        // Predicated region
        $region17: #{tpu_custom_call.1} parent=11 // pred_check
          %p165 = pneg %p79
        $region18: #{tpu_custom_call.1} parent=11 // pred_check_branch
          %167 = sbr.rel (%p165) target = $region20
        $region19: #{tpu_custom_call.1} parent=11 // pred_region
          _
        $region20: #{tpu_custom_call.1} parent=11 // pred_fallthru
          _
        // Predicated region
        $region21: #{tpu_custom_call.1} parent=11 // pred_check
          %p168 = pneg %p100
        $region22: #{tpu_custom_call.1} parent=11 // pred_check_branch
          %170 = sbr.rel (%p168) target = $region24
        $region23: #{tpu_custom_call.1} parent=11 // pred_region
          _
        $region24: #{tpu_custom_call.1} parent=11 // pred_fallthru
          _
        // Predicated region
        $region25: #{tpu_custom_call.1} parent=11 // pred_check
          %p171 = pneg %p121
        $region26: #{tpu_custom_call.1} parent=11 // pred_check_branch
          %173 = sbr.rel (%p171) target = $region28
        $region27: #{tpu_custom_call.1} parent=11 // pred_region
          _
        $region28: #{tpu_custom_call.1} parent=11 // pred_fallthru
          _
      $region12: #{tpu_custom_call.1} parent=5 // pred_fallthru
        _
      %p174 = scmp.lt.s32.totalorder %s11, 2
      // Predicated region
      $region29: #{tpu_custom_call.1} parent=5 // pred_check
        %p175 = pneg %p174
      $region30: #{tpu_custom_call.1} parent=5 // pred_check_branch
        %177 = sbr.rel (%p175) target = $region32
      $region31: #{tpu_custom_call.1} parent=5 // pred_region
        // Predicated region
        $region33: #{tpu_custom_call.1} parent=31 // pred_check
          %p178 = pneg %p31
        $region34: #{tpu_custom_call.1} parent=31 // pred_check_branch
          %180 = sbr.rel (%p178) target = $region36
        $region35: #{tpu_custom_call.1} parent=31 // pred_region
          %s181 = smul.u32 4, %s11
          %s182 = ssub.s32 5, %s181
          %p183 = scmp.lt.s32.totalorder %s182, 4
          %s184 = scalar_select %p183, %s182, 4
          %s185 = smul.u32 128, %s184
          %p186 = scmp.lt.s32.totalorder %s181, 4
          %s187 = scalar_select %p186, %s181, 4
          %s188 = smul.addr %s187, 8
          %s189 = scalar_lea.vmem %s0, %s188
          %s190 = smul.u32 4, %s11
          %s191 = ssub.s32 5, %s190
          %p192 = scmp.lt.s32.totalorder %s191, 4
          %s193 = scalar_select %p192, %s191, 4
          %s194 = smul.u32 128, %s193
        $region36: #{tpu_custom_call.1} parent=31 // pred_fallthru
          _
      $region32: #{tpu_custom_call.1} parent=5 // pred_fallthru
        _
      %p195 = scmp.le.s32.totalorder 1, %s11
      %p196 = scmp.lt.s32.totalorder %s11, 3
      %p197 = pnand %p195, %p196
      %p198 = pneg %p197
      // Predicated region
      $region37: #{tpu_custom_call.1} parent=5 // pred_check
        _
      $region38: #{tpu_custom_call.1} parent=5 // pred_check_branch
        %200 = sbr.rel (%p197) target = $region40
      $region39: #{tpu_custom_call.1} parent=5 // pred_region
        %s201 = ssub.s32 %s11, 1
        %s202 = smul.u32 4, %s16
        %s203 = ssub.s32 5, %s202
        %p204 = scmp.lt.s32.totalorder %s203, 4
        %s205 = scalar_select %p204, %s203, 4
        %s206 = smul.u32 128, %s205
        %p207 = scmp.lt.s32.totalorder %s202, 4
        %s208 = scalar_select %p207, %s202, 4
        %s209 = smul.addr %s208, 8
        %s210 = scalar_lea.vmem %s0, %s209
        %p211 = pneg %p37
        %p212 = pneg %p34
        %p213 = pneg %p58
        %p214 = pneg %p55
        %p215 = pneg %p79
        %p216 = pneg %p76
        %p217 = pneg %p100
        %p218 = pneg %p97
        %p219 = pneg %p121
        %p220 = pneg %p118
        %p221 = pneg %p147
        %p222 = pneg %p144
        %s223 = sand.u32 %s134, 1
        %s224 = sand.u32 %s134, 1
        %s225 = smul.addr %s224, 32
        %s226 = scalar_lea.vmem [#allocation2], %s225
        %s227 = smul.u32 4, %s16
        %s228 = ssub.s32 5, %s227
        %p229 = scmp.lt.s32.totalorder %s228, 4
        %s230 = scalar_select %p229, %s228, 4
        %s231 = smul.u32 128, %s230
        %p232 = scmp.lt.s32.totalorder %s227, 4
        %s233 = scalar_select %p232, %s227, 4
        %s234 = smul.addr %s233, 8
        %s235 = scalar_lea.vmem %s0, %s234
        %s236 = smul.u32 4, %s16
        %s237 = ssub.s32 5, %s236
        %p238 = scmp.lt.s32.totalorder %s237, 4
        %s239 = scalar_select %p238, %s237, 4
        %s240 = smul.u32 128, %s239
        %s241 = smul.u32 4, %s16
        %s242 = ssub.s32 5, %s241
        %p243 = scmp.lt.s32.totalorder %s242, 4
        %s244 = scalar_select %p243, %s242, 4
        %s245 = smul.u32 128, %s244
        %v247 = vld [vmem:[%s4] sm:$0x1]
        %v248 = vld [vmem:[%s4 + $0x1] sm:$0x1]
        %v249 = vld [vmem:[%s4 + $0x2] sm:$0x1]
        %v250 = vld [vmem:[%s4 + $0x3] sm:$0x1]
        %v251 = vld [vmem:[%s4 + $0x4] sm:$0x1]
        %v252 = vld [vmem:[%s235] sm:$0xff]
        %v253 = vld [vmem:[%s235 + $0x8] sm:$0xff]
        %v254 = vld [vmem:[%s235 + $0x10] sm:$0xff]
        %v255 = vld [vmem:[%s235 + $0x18] sm:$0xff]
        %v256 = vpack.c.bf16 %v253, %v252
        %v257 = vpack.c.bf16 %v255, %v254
        %v258 = vld [vmem:[%s1] sm:$0xf]
        %v259 = vld [vmem:[%s1 + $0x4] sm:$0xf]
        %v260 = vld [vmem:[%s1 + $0x8] sm:$0xf]
        %v261 = vld [vmem:[%s1 + $0xc] sm:$0xf]
        %v262 = vlaneseq
        %v263 = vshrl.u32 %v262, 7
        %v264 = vsub.s32 0, %v263
        %v265 = vrot.slane %v247, %v264
        %v270 = vunpack.c.l.b16 %v258
        %v271 = vunpack.c.l.b16 %v259
        %v272 = vunpack.c.l.b16 %v260
        %v273 = vunpack.c.l.b16 %v261
        %v274 = vpack.c.b16 %v271, %v270
        %v275 = vpack.c.b16 %v273, %v272
        %vm278 = vcmask 261120
        %v280 = vsel %vm278, %v256, 0
        %v283 = vsel %vm278, %v257, 0
        %285 = vmatprep.subr.bf16.mxu0 0
        %286 = vmatpush1.bf16.msra.mxu0 %v274
        %287 = vmatprep.subr.bf16.mxu0 0
        %288 = vmatpush1.bf16.msra.mxu0 %v275
        %289 = vmatprep.subr.bf16.mxu0 0
        %290 = vmatpush1.bf16.msra.mxu0 0
        %291 = vmatprep.subr.bf16.mxu0 0
        %292 = vmatpush1.bf16.msra.mxu0 0
        %293 = vmatprep.subr.bf16.mxu0 0
        %294 = vmatpush1.bf16.msra.mxu0 0
        %295 = vmatprep.subr.bf16.mxu0 0
        %296 = vmatpush1.bf16.msra.mxu0 0
        %297 = vmatprep.subr.bf16.mxu0 0
        %298 = vmatpush1.bf16.msra.mxu0 0
        %299 = vmatprep.subr.bf16.mxu0 0
        %300 = vmatpush1.bf16.msra.mxu0 0
        %301 = vmatprep.subr.bf16.mxu0 0
        %302 = vmatpush1.bf16.msra.mxu0 0
        %303 = vmatprep.subr.bf16.mxu0 0
        %304 = vmatpush1.bf16.msra.mxu0 0
        %305 = vmatprep.subr.bf16.mxu0 0
        %306 = vmatpush1.bf16.msra.mxu0 0
        %307 = vmatprep.subr.bf16.mxu0 0
        %308 = vmatpush1.bf16.msra.mxu0 0
        %309 = vmatprep.subr.bf16.mxu0 0
        %310 = vmatpush1.bf16.msra.mxu0 0
        %311 = vmatprep.subr.bf16.mxu0 0
        %312 = vmatpush1.bf16.msra.mxu0 0
        %313 = vmatprep.subr.bf16.mxu0 0
        %314 = vmatpush1.bf16.msra.mxu0 0
        %315 = vmatprep.subr.bf16.mxu0 0
        %316 = vmatpush1.bf16.msra.mxu0 0
        %317 = vmatprep.mubr.bf16.mxu0 0
        %318 = vmatmul.mubr.bf16.gmra.mrb[0].mxu0 %v280
        %v319 = vpop.f32.mrb[0].mxu0
        %v320 = vadd.f32 %v265, %v319
        %v321 = vpop.f32.mrb[0].mxu0
        %v322 = vpop.f32.mrb[0].mxu0
        %v323 = vadd.f32 %v265, %v322
        %v324 = vpop.f32.mrb[0].mxu0
        %325 = vmatprep.mubr.bf16.mxu0 0
        %326 = vmatmul.mubr.bf16.gmra.mrb[0].mxu0 %v283
        %v327 = vpop.f32.mrb[0].mxu0
        %v328 = vadd.f32 %v265, %v327
        %v329 = vpop.f32.mrb[0].mxu0
        %v330 = vpop.f32.mrb[0].mxu0
        %v331 = vadd.f32 %v265, %v330
        %v332 = vpop.f32.mrb[0].mxu0
        %333 = vdwg.mxu0
        %v334 = vmax.f32 %v320, 0.0
        %v335 = vmax.f32 %v323, 0.0
        %v336 = vmax.f32 %v328, 0.0
        %v337 = vmax.f32 %v331, 0.0
        %v338 = vpack.c.bf16 %v335, %v334
        %v339 = vpack.c.bf16 %v337, %v336
        %v340 = vld [vmem:[%s2] sm:$0xf]
        %v341 = vld [vmem:[%s2 + $0x4] sm:$0xf]
        %v342 = vld [vmem:[%s2 + $0x8] sm:$0xf]
        %v343 = vld [vmem:[%s2 + $0xc] sm:$0xf]
        %v344 = vlaneseq
        %v345 = vshrl.u32 %v344, 7
        %v346 = vsub.s32 0, %v345
        %v347 = vrot.slane %v248, %v346
        %v352 = vunpack.c.l.b16 %v340
        %v353 = vunpack.c.l.b16 %v341
        %v354 = vunpack.c.l.b16 %v342
        %v355 = vunpack.c.l.b16 %v343
        %v356 = vpack.c.b16 %v353, %v352
        %v357 = vpack.c.b16 %v355, %v354
        %v361 = vsel %vm278, %v338, 0
        %v364 = vsel %vm278, %v339, 0
        %366 = vmatprep.subr.bf16.mxu0 0
        %367 = vmatpush1.bf16.msra.mxu0 %v356
        %368 = vmatprep.subr.bf16.mxu0 0
        %369 = vmatpush1.bf16.msra.mxu0 %v357
        %370 = vmatprep.subr.bf16.mxu0 0
        %371 = vmatpush1.bf16.msra.mxu0 0
        %372 = vmatprep.subr.bf16.mxu0 0
        %373 = vmatpush1.bf16.msra.mxu0 0
        %374 = vmatprep.subr.bf16.mxu0 0
        %375 = vmatpush1.bf16.msra.mxu0 0
        %376 = vmatprep.subr.bf16.mxu0 0
        %377 = vmatpush1.bf16.msra.mxu0 0
        %378 = vmatprep.subr.bf16.mxu0 0
        %379 = vmatpush1.bf16.msra.mxu0 0
        %380 = vmatprep.subr.bf16.mxu0 0
        %381 = vmatpush1.bf16.msra.mxu0 0
        %382 = vmatprep.subr.bf16.mxu0 0
        %383 = vmatpush1.bf16.msra.mxu0 0
        %384 = vmatprep.subr.bf16.mxu0 0
        %385 = vmatpush1.bf16.msra.mxu0 0
        %386 = vmatprep.subr.bf16.mxu0 0
        %387 = vmatpush1.bf16.msra.mxu0 0
        %388 = vmatprep.subr.bf16.mxu0 0
        %389 = vmatpush1.bf16.msra.mxu0 0
        %390 = vmatprep.subr.bf16.mxu0 0
        %391 = vmatpush1.bf16.msra.mxu0 0
        %392 = vmatprep.subr.bf16.mxu0 0
        %393 = vmatpush1.bf16.msra.mxu0 0
        %394 = vmatprep.subr.bf16.mxu0 0
        %395 = vmatpush1.bf16.msra.mxu0 0
        %396 = vmatprep.subr.bf16.mxu0 0
        %397 = vmatpush1.bf16.msra.mxu0 0
        %398 = vmatprep.mubr.bf16.mxu0 0
        %399 = vmatmul.mubr.bf16.gmra.mrb[0].mxu0 %v361
        %v400 = vpop.f32.mrb[0].mxu0
        %v401 = vadd.f32 %v347, %v400
        %v402 = vpop.f32.mrb[0].mxu0
        %v403 = vpop.f32.mrb[0].mxu0
        %v404 = vadd.f32 %v347, %v403
        %v405 = vpop.f32.mrb[0].mxu0
        %406 = vmatprep.mubr.bf16.mxu0 0
        %407 = vmatmul.mubr.bf16.gmra.mrb[0].mxu0 %v364
        %v408 = vpop.f32.mrb[0].mxu0
        %v409 = vadd.f32 %v347, %v408
        %v410 = vpop.f32.mrb[0].mxu0
        %v411 = vpop.f32.mrb[0].mxu0
        %v412 = vadd.f32 %v347, %v411
        %v413 = vpop.f32.mrb[0].mxu0
        %414 = vdwg.mxu0
        %v415 = vmax.f32 %v401, 0.0
        %v416 = vmax.f32 %v404, 0.0
        %v417 = vmax.f32 %v409, 0.0
        %v418 = vmax.f32 %v412, 0.0
        %v419 = vpack.c.bf16 %v416, %v415
        %v420 = vpack.c.bf16 %v418, %v417
        %v421 = vld [vmem:[%s3] sm:$0xf]
        %v422 = vld [vmem:[%s3 + $0x4] sm:$0xf]
        %v423 = vld [vmem:[%s3 + $0x8] sm:$0xf]
        %v424 = vld [vmem:[%s3 + $0xc] sm:$0xf]
        %v425 = vlaneseq
        %v426 = vshrl.u32 %v425, 7
        %v427 = vsub.s32 0, %v426
        %v428 = vrot.slane %v249, %v427
        %v433 = vunpack.c.l.b16 %v421
        %v434 = vunpack.c.l.b16 %v422
        %v435 = vunpack.c.l.b16 %v423
        %v436 = vunpack.c.l.b16 %v424
        %v437 = vpack.c.b16 %v434, %v433
        %v438 = vpack.c.b16 %v436, %v435
        %v442 = vsel %vm278, %v419, 0
        %v445 = vsel %vm278, %v420, 0
        %447 = vmatprep.subr.bf16.mxu0 0
        %448 = vmatpush1.bf16.msra.mxu0 %v437
        %449 = vmatprep.subr.bf16.mxu0 0
        %450 = vmatpush1.bf16.msra.mxu0 %v438
        %451 = vmatprep.subr.bf16.mxu0 0
        %452 = vmatpush1.bf16.msra.mxu0 0
        %453 = vmatprep.subr.bf16.mxu0 0
        %454 = vmatpush1.bf16.msra.mxu0 0
        %455 = vmatprep.subr.bf16.mxu0 0
        %456 = vmatpush1.bf16.msra.mxu0 0
        %457 = vmatprep.subr.bf16.mxu0 0
        %458 = vmatpush1.bf16.msra.mxu0 0
        %459 = vmatprep.subr.bf16.mxu0 0
        %460 = vmatpush1.bf16.msra.mxu0 0
        %461 = vmatprep.subr.bf16.mxu0 0
        %462 = vmatpush1.bf16.msra.mxu0 0
        %463 = vmatprep.subr.bf16.mxu0 0
        %464 = vmatpush1.bf16.msra.mxu0 0
        %465 = vmatprep.subr.bf16.mxu0 0
        %466 = vmatpush1.bf16.msra.mxu0 0
        %467 = vmatprep.subr.bf16.mxu0 0
        %468 = vmatpush1.bf16.msra.mxu0 0
        %469 = vmatprep.subr.bf16.mxu0 0
        %470 = vmatpush1.bf16.msra.mxu0 0
        %471 = vmatprep.subr.bf16.mxu0 0
        %472 = vmatpush1.bf16.msra.mxu0 0
        %473 = vmatprep.subr.bf16.mxu0 0
        %474 = vmatpush1.bf16.msra.mxu0 0
        %475 = vmatprep.subr.bf16.mxu0 0
        %476 = vmatpush1.bf16.msra.mxu0 0
        %477 = vmatprep.subr.bf16.mxu0 0
        %478 = vmatpush1.bf16.msra.mxu0 0
        %479 = vmatprep.mubr.bf16.mxu0 0
        %480 = vmatmul.mubr.bf16.gmra.mrb[0].mxu0 %v442
        %v481 = vpop.f32.mrb[0].mxu0
        %v482 = vadd.f32 %v428, %v481
        %v483 = vpop.f32.mrb[0].mxu0
        %v484 = vpop.f32.mrb[0].mxu0
        %v485 = vadd.f32 %v428, %v484
        %v486 = vpop.f32.mrb[0].mxu0
        %487 = vmatprep.mubr.bf16.mxu0 0
        %488 = vmatmul.mubr.bf16.gmra.mrb[0].mxu0 %v445
        %v489 = vpop.f32.mrb[0].mxu0
        %v490 = vadd.f32 %v428, %v489
        %v491 = vpop.f32.mrb[0].mxu0
        %v492 = vpop.f32.mrb[0].mxu0
        %v493 = vadd.f32 %v428, %v492
        %v494 = vpop.f32.mrb[0].mxu0
        %495 = vdwg.mxu0
        %v496 = vmul.f32 %v482, %v482
        %v497 = vmul.f32 %v485, %v485
        %v498 = vmul.f32 %v490, %v490
        %v499 = vmul.f32 %v493, %v493
        %vm500 = vcmask 130048
        %v501 = vsel %vm500, %v496, 0.0
        %502 = vadd.xlane.f32.xlu0 %v501
        %v503 = vpop.xlane.xlu0 %502
        %v504 = vsel %vm500, %v497, 0.0
        %505 = vadd.xlane.f32.xlu0 %v504
        %v506 = vpop.xlane.xlu0 %505
        %v507 = vsel %vm500, %v498, 0.0
        %508 = vadd.xlane.f32.xlu0 %v507
        %v509 = vpop.xlane.xlu0 %508
        %v510 = vsel %vm500, %v499, 0.0
        %511 = vadd.xlane.f32.xlu0 %v510
        %v512 = vpop.xlane.xlu0 %511
        %v513 = vmax.f32 %v503, 1e-24
        %v514 = vmax.f32 %v506, 1e-24
        %v515 = vmax.f32 %v509, 1e-24
        %v516 = vmax.f32 %v512, 1e-24
        %v517 = vrsqrt.pop %v513
        %v518 = vrsqrt.pop %v514
        %v519 = vrsqrt.pop %v515
        %v520 = vrsqrt.pop %v516
        %v521 = vmul.f32 %v482, %v517
        %v522 = vmul.f32 %v485, %v518
        %v523 = vmul.f32 %v490, %v519
        %v524 = vmul.f32 %v493, %v520
        %v525 = vsel %vm500, %v521, 0.0
        %526 = vadd.xlane.f32.xlu0 %v525
        %v527 = vpop.xlane.xlu0 %526
        %v528 = vsel %vm500, %v522, 0.0
        %529 = vadd.xlane.f32.xlu0 %v528
        %v530 = vpop.xlane.xlu0 %529
        %v531 = vsel %vm500, %v523, 0.0
        %532 = vadd.xlane.f32.xlu0 %v531
        %v533 = vpop.xlane.xlu0 %532
        %v534 = vsel %vm500, %v524, 0.0
        %535 = vadd.xlane.f32.xlu0 %v534
        %v536 = vpop.xlane.xlu0 %535
        %v537 = vmul.f32 %v527, 0.0625
        %v538 = vmul.f32 %v530, 0.0625
        %v539 = vmul.f32 %v533, 0.0625
        %v540 = vmul.f32 %v536, 0.0625
        %v541 = vsub.f32 %v521, %v537
        %v542 = vsub.f32 %v522, %v538
        %v543 = vsub.f32 %v523, %v539
        %v544 = vsub.f32 %v524, %v540
        %v545 = vmul.f32 %v541, %v541
        %v546 = vmul.f32 %v542, %v542
        %v547 = vmul.f32 %v543, %v543
        %v548 = vmul.f32 %v544, %v544
        %v549 = vsel %vm500, %v545, 0.0
        %550 = vadd.xlane.f32.xlu0 %v549
        %v551 = vpop.xlane.xlu0 %550
        %v552 = vsel %vm500, %v546, 0.0
        %553 = vadd.xlane.f32.xlu0 %v552
        %v554 = vpop.xlane.xlu0 %553
        %v555 = vsel %vm500, %v547, 0.0
        %556 = vadd.xlane.f32.xlu0 %v555
        %v557 = vpop.xlane.xlu0 %556
        %v558 = vsel %vm500, %v548, 0.0
        %559 = vadd.xlane.f32.xlu0 %v558
        %v560 = vpop.xlane.xlu0 %559
        %v561 = vmul.f32 %v551, 0.0625
        %v562 = vmul.f32 %v554, 0.0625
        %v563 = vmul.f32 %v557, 0.0625
        %v564 = vmul.f32 %v560, 0.0625
        %v565 = vadd.f32 %v561, 1e-05
        %v566 = vadd.f32 %v562, 1e-05
        %v567 = vadd.f32 %v563, 1e-05
        %v568 = vadd.f32 %v564, 1e-05
        %v569 = vrsqrt.pop %v565
        %v570 = vrsqrt.pop %v566
        %v571 = vrsqrt.pop %v567
        %v572 = vrsqrt.pop %v568
        %v573 = vmul.f32 %v541, %v569
        %v574 = vmul.f32 %v542, %v570
        %v575 = vmul.f32 %v543, %v571
        %v576 = vmul.f32 %v544, %v572
        %v577 = vlaneseq
        %v578 = vshrl.u32 %v577, 7
        %v579 = vsub.s32 0, %v578
        %v580 = vrot.slane %v250, %v579
        %v581 = vmul.f32 %v573, %v580
        %v582 = vmul.f32 %v574, %v580
        %v583 = vmul.f32 %v575, %v580
        %v584 = vmul.f32 %v576, %v580
        %v585 = vlaneseq
        %v586 = vshrl.u32 %v585, 7
        %v587 = vsub.s32 0, %v586
        %v588 = vrot.slane %v251, %v587
        %v589 = vadd.f32 %v581, %v588
        %v590 = vadd.f32 %v582, %v588
        %v591 = vadd.f32 %v583, %v588
        %v592 = vadd.f32 %v584, %v588
        %593 = vst.msk [vmem:[%s226] sm:$0xff] %vm500, %v589
        %594 = vst.msk [vmem:[%s226 + $0x8] sm:$0xff] %vm500, %v590
        %595 = vst.msk [vmem:[%s226 + $0x10] sm:$0xff] %vm500, %v591
        %596 = vst.msk [vmem:[%s226 + $0x18] sm:$0xff] %vm500, %v592
        %s597 = sand.u32 %s134, 1
        %s598 = sand.u32 %s134, 1
        %s599 = smul.addr %s598, 32
        %s600 = scalar_lea.vmem [#allocation2], %s599
        // Predicated region
        $region41: #{tpu_custom_call.1} parent=39 // pred_check
          %p601 = pneg %p144
        $region42: #{tpu_custom_call.1} parent=39 // pred_check_branch
          %603 = sbr.rel (%p601) target = $region44
        $region43: #{tpu_custom_call.1} parent=39 // pred_region
          %s604 = smul.u32 4, %s16
          %s605 = ssub.s32 5, %s604
          %p606 = scmp.lt.s32.totalorder %s605, 4
          %s607 = scalar_select %p606, %s605, 4
          %s608 = smul.u32 128, %s607
          %p609 = scmp.ne.s32.totalorder 0, %s608
          %s610 = smul.addr %s604, 8
          %s611 = scalar_lea.vmem %s5, %s610
          // Predicated region
          $region45: #{tpu_custom_call.1} parent=43 // pred_check
            %p612 = pneg %p609
          $region46: #{tpu_custom_call.1} parent=43 // pred_check_branch
            %614 = sbr.rel (%p612) target = $region48
          $region47: #{tpu_custom_call.1} parent=43 // pred_region
            // Predicated region
            $region49: #{tpu_custom_call.1} parent=47 // pred_check
              _
            $region50: #{tpu_custom_call.1} parent=47 // pred_check_branch
              %616 = sbr.rel (0) target = $region52
            $region51: #{tpu_custom_call.1} parent=47 // pred_region
              // Predicated region
              $region71: #{tpu_custom_call.1} parent=51 // pred_check
                _
              $region72: #{tpu_custom_call.1} parent=51 // pred_check_branch
                %671 = sbr.rel (0) target = $region74
              $region73: #{tpu_custom_call.1} parent=51 // pred_region
                %s672 = sshrl.u32 %s607, 2
                // While loop
                $region75: #{tpu_custom_call.1} parent=73 // loop_pre_header
                  _
                $region76: #{tpu_custom_call.1} parent=73 // loop_header
                  %s674 = sphi 0, %s676
                  %p675 = scmp.ge.s32.totalorder %s674, %s672
                  %s679 = sphi 0, %s692
                  %s680 = sphi %s600, %s695
                  %s681 = sphi %s611, %s696
                $region77: #{tpu_custom_call.1} parent=73 // loop_header_branch
                  %678 = sbr.rel (%p675) target = $region81
                $region78: #{tpu_custom_call.1} parent=73 // loop_body
                  %v682 = vld [vmem:[%s680] sm:$0xff]
                  %683 = vst [vmem:[%s681] sm:$0xff] %v682
                  %v684 = vld [vmem:[%s680 + $0x8] sm:$0xff]
                  %685 = vst [vmem:[%s681 + $0x8] sm:$0xff] %v684
                  %v686 = vld [vmem:[%s680 + $0x10] sm:$0xff]
                  %687 = vst [vmem:[%s681 + $0x10] sm:$0xff] %v686
                  %v688 = vld [vmem:[%s680 + $0x18] sm:$0xff]
                  %689 = vst [vmem:[%s681 + $0x18] sm:$0xff] %v688
                  %s690 = sadd.s32 1, %s679
                  %p691 = scmp.ge.s32.totalorder %s690, %s672
                  %s692 = scalar_select %p691, 0, %s690
                  %s693 = smul.u32 %s692, 32
                  %s694 = smul.u32 %s692, 32
                  %s695 = scalar_lea.vmem %s600, %s693 [#allocation2]
                  %s696 = scalar_lea.vmem %s611, %s694
                $region79: #{tpu_custom_call.1} parent=73 // loop_footer
                  %s676 = sadd.s32 %s674, 1
                $region80: #{tpu_custom_call.1} parent=73 // loop_footer_branch
                  %673 = sbr.rel target = $region76
                $region81: #{tpu_custom_call.1} parent=73 // loop_exit
                  _
                %s697 = sshrl.u32 %s607, 2
                %s698 = sand.u32 %s607, 3
                %s699 = smul.u32 %s697, 4
                %s700 = smul.u32 8, %s699
                %s701 = scalar_lea.vmem %s600, %s700 [#allocation2]
                %s702 = smul.u32 8, %s699
                %s703 = scalar_lea.vmem %s611, %s702
                // While loop
                $region82: #{tpu_custom_call.1} parent=73 // loop_pre_header
                  _
                $region83: #{tpu_custom_call.1} parent=73 // loop_header
                  %s705 = sphi 0, %s707
                  %p706 = scmp.ge.s32.totalorder %s705, %s698
                  %s710 = sphi 0, %s717
                  %s711 = sphi %s701, %s720
                  %s712 = sphi %s703, %s721
                $region84: #{tpu_custom_call.1} parent=73 // loop_header_branch
                  %709 = sbr.rel (%p706) target = $region88
                $region85: #{tpu_custom_call.1} parent=73 // loop_body
                  %v713 = vld [vmem:[%s711] sm:$0xff]
                  %714 = vst [vmem:[%s712] sm:$0xff] %v713
                  %s715 = sadd.s32 1, %s710
                  %p716 = scmp.ge.s32.totalorder %s715, %s698
                  %s717 = scalar_select %p716, 0, %s715
                  %s718 = smul.u32 %s717, 8
                  %s719 = smul.u32 %s717, 8
                  %s720 = scalar_lea.vmem %s701, %s718 [#allocation2]
                  %s721 = scalar_lea.vmem %s703, %s719
                $region86: #{tpu_custom_call.1} parent=73 // loop_footer
                  %s707 = sadd.s32 %s705, 1
                $region87: #{tpu_custom_call.1} parent=73 // loop_footer_branch
                  %704 = sbr.rel target = $region83
                $region88: #{tpu_custom_call.1} parent=73 // loop_exit
                  _
              $region74: #{tpu_custom_call.1} parent=51 // pred_fallthru
                _
              // Predicated region
              $region89: #{tpu_custom_call.1} parent=51 // pred_check
                _
              $region90: #{tpu_custom_call.1} parent=51 // pred_check_branch
                %723 = sbr.rel target = $region92
              $region91: #{tpu_custom_call.1} parent=51 // pred_region
                _
              $region92: #{tpu_custom_call.1} parent=51 // pred_fallthru
                _
            $region52: #{tpu_custom_call.1} parent=47 // pred_fallthru
              _
            // Predicated region
            $region53: #{tpu_custom_call.1} parent=47 // pred_check
              _
            $region54: #{tpu_custom_call.1} parent=47 // pred_check_branch
              %618 = sbr.rel target = $region56
            $region55: #{tpu_custom_call.1} parent=47 // pred_region
              %s620 = sshrl.u32 %s607, 2
              // While loop
              $region57: #{tpu_custom_call.1} parent=55 // loop_pre_header
                _
              $region58: #{tpu_custom_call.1} parent=55 // loop_header
                %s622 = sphi 0, %s624
                %p623 = scmp.ge.s32.totalorder %s622, %s620
                %s627 = sphi 0, %s640
                %s628 = sphi %s600, %s643
                %s629 = sphi %s611, %s644
              $region59: #{tpu_custom_call.1} parent=55 // loop_header_branch
                %626 = sbr.rel (%p623) target = $region63
              $region60: #{tpu_custom_call.1} parent=55 // loop_body
                %v630 = vld [vmem:[%s628] sm:$0xff]
                %631 = vst [vmem:[%s629] sm:$0xff] %v630
                %v632 = vld [vmem:[%s628 + $0x8] sm:$0xff]
                %633 = vst [vmem:[%s629 + $0x8] sm:$0xff] %v632
                %v634 = vld [vmem:[%s628 + $0x10] sm:$0xff]
                %635 = vst [vmem:[%s629 + $0x10] sm:$0xff] %v634
                %v636 = vld [vmem:[%s628 + $0x18] sm:$0xff]
                %637 = vst [vmem:[%s629 + $0x18] sm:$0xff] %v636
                %s638 = sadd.s32 1, %s627
                %p639 = scmp.ge.s32.totalorder %s638, %s620
                %s640 = scalar_select %p639, 0, %s638
                %s641 = smul.u32 %s640, 32
                %s642 = smul.u32 %s640, 32
                %s643 = scalar_lea.vmem %s600, %s641 [#allocation2]
                %s644 = scalar_lea.vmem %s611, %s642
              $region61: #{tpu_custom_call.1} parent=55 // loop_footer
                %s624 = sadd.s32 %s622, 1
              $region62: #{tpu_custom_call.1} parent=55 // loop_footer_branch
                %621 = sbr.rel target = $region58
              $region63: #{tpu_custom_call.1} parent=55 // loop_exit
                _
              %s645 = sshrl.u32 %s607, 2
              %s646 = sand.u32 %s607, 3
              %s647 = smul.u32 %s645, 4
              %s648 = smul.u32 8, %s647
              %s649 = scalar_lea.vmem %s600, %s648 [#allocation2]
              %s650 = smul.u32 8, %s647
              %s651 = scalar_lea.vmem %s611, %s650
              // While loop
              $region64: #{tpu_custom_call.1} parent=55 // loop_pre_header
                _
              $region65: #{tpu_custom_call.1} parent=55 // loop_header
                %s653 = sphi 0, %s655
                %p654 = scmp.ge.s32.totalorder %s653, %s646
                %s658 = sphi 0, %s665
                %s659 = sphi %s649, %s668
                %s660 = sphi %s651, %s669
              $region66: #{tpu_custom_call.1} parent=55 // loop_header_branch
                %657 = sbr.rel (%p654) target = $region70
              $region67: #{tpu_custom_call.1} parent=55 // loop_body
                %v661 = vld [vmem:[%s659] sm:$0xff]
                %662 = vst [vmem:[%s660] sm:$0xff] %v661
                %s663 = sadd.s32 1, %s658
                %p664 = scmp.ge.s32.totalorder %s663, %s646
                %s665 = scalar_select %p664, 0, %s663
                %s666 = smul.u32 %s665, 8
                %s667 = smul.u32 %s665, 8
                %s668 = scalar_lea.vmem %s649, %s666 [#allocation2]
                %s669 = scalar_lea.vmem %s651, %s667
              $region68: #{tpu_custom_call.1} parent=55 // loop_footer
                %s655 = sadd.s32 %s653, 1
              $region69: #{tpu_custom_call.1} parent=55 // loop_footer_branch
                %652 = sbr.rel target = $region65
              $region70: #{tpu_custom_call.1} parent=55 // loop_exit
                _
            $region56: #{tpu_custom_call.1} parent=47 // pred_fallthru
              _
          $region48: #{tpu_custom_call.1} parent=43 // pred_fallthru
            _
          %724 = vnop
        $region44: #{tpu_custom_call.1} parent=39 // pred_fallthru
          _
      $region40: #{tpu_custom_call.1} parent=5 // pred_fallthru
        _
      %p725 = scmp.le.s32.totalorder 2, %s11
      // Predicated region
      $region93: #{tpu_custom_call.1} parent=5 // pred_check
        %p726 = pneg %p725
      $region94: #{tpu_custom_call.1} parent=5 // pred_check_branch
        %728 = sbr.rel (%p726) target = $region96
      $region95: #{tpu_custom_call.1} parent=5 // pred_region
        %s729 = ssub.s32 %s11, 2
        // Predicated region
        $region97: #{tpu_custom_call.1} parent=95 // pred_check
          %p730 = pneg %p150
        $region98: #{tpu_custom_call.1} parent=95 // pred_check_branch
          %732 = sbr.rel (%p730) target = $region100
        $region99: #{tpu_custom_call.1} parent=95 // pred_region
          %s733 = sand.u32 %s135, 1
          %s734 = sand.u32 %s135, 1
          %s735 = smul.addr %s734, 32
          %s736 = scalar_lea.vmem [#allocation2], %s735
        $region100: #{tpu_custom_call.1} parent=95 // pred_fallthru
          _
      $region96: #{tpu_custom_call.1} parent=5 // pred_fallthru
        _
    $region6: #{tpu_custom_call.1} parent=1 // loop_footer
      %s15 = sadd.s32 1, %s11
    $region7: #{tpu_custom_call.1} parent=1 // loop_footer_branch
      %10 = sbr.rel target = $region3
    $region8: #{tpu_custom_call.1} parent=1 // loop_exit
      _

</llo_original>
